<compile_context>
chip_gen: v7x
topology: tpu7x:2x2x1
jax: 0.10.0
libtpu: 0.0.40
codegen_flags: <defaults>
</compile_context>

<pallas_src>
import math

import jax
import jax.numpy as jnp
import numpy as np
from jax.experimental import pallas as pl
from jax.experimental.pallas import tpu as pltpu


# ----------------------------------------------------------------------------
# Pallas kernel: fused (im2col'd) 3x3x3 conv == one MXU matmul + bias
# ----------------------------------------------------------------------------
def _upsample_conv_kernel(x_ref, w_ref, b_ref, o_ref):
    """x_ref : (D*H2, 9*(W2+2)*Cin)  bf16  activation, all 27 taps folded on K
       w_ref : (9*(W2+2)*Cin, W2*Cout) bf16 block-banded conv weight
       b_ref : (1, W2*Cout)          f32   bias tiled along w
       o_ref : (D*H2, W2*Cout)       f32   lane-dense output (row = d*H2 + h)"""
    acc = jnp.dot(x_ref[...], w_ref[...], preferred_element_type=jnp.float32)
    o_ref[...] = acc + b_ref[...]


def upsample_conv_forward(w, b, x):
    """UpsampleConv.forward for a 4D input x (A, C, H, W), A == conv in-channels.

    w: (3, 3, 3, Cin, Cout) conv weights (Cin == A), b: (Cout,).
    Returns (Cout, C, 2H, 2W), matching the PyTorch module on a 4D input.
    """
    A, C, H, W = x.shape
    Cin, Cout = w.shape[3], w.shape[4]
    assert A == Cin, "Conv3d in_channels must match the leading dim of the 4D input"

    # --- torch.cat([x]*4, dim=1) + PixelShuffle(2): exact channel interleave ---
    y = jnp.concatenate([x, x, x, x], axis=1).reshape(A, C, 2, 2, H, W)
    y = jnp.transpose(y, (0, 1, 4, 2, 5, 3)).reshape(A, C, 2 * H, 2 * W)

    # --- Conv3d(k=3, pad=1) on the unbatched volume (Cin=A, D=C, H2, W2) ---
    D, H2, W2 = C, 2 * H, 2 * W
    v = jnp.transpose(y, (1, 2, 3, 0))                    # (D, H2, W2, Cin)
    vp = jnp.pad(v, ((1, 1), (1, 1), (1, 1), (0, 0)))     # zero padding = 1

    KW = (W2 + 2) * Cin            # per-(kd,kh) K width; kw lives in the weight
    K = 9 * KW                     # full contraction depth (all 27 taps)

    # Activation: 9 (kd,kh)-shifted windows with (w, cin) flat on lanes,
    # concatenated along K. ~0.3 MB bf16; built once by XLA, no in-kernel slicing.
    xcat = jnp.concatenate(
        [vp[kd:kd + D, kh:kh + H2].reshape(D * H2, KW)
         for kd in range(3) for kh in range(3)],
        axis=-1).astype(jnp.bfloat16)

    # Block-banded weight: wcat[t*KW + ww*Cin + i, q*Cout + o] = w[kd, kh, ww-q, i, o]
    # (zero outside the 3-wide band), t = kd*3 + kh.  ~0.3 MB bf16.
    shift = (jnp.arange(W2 + 2)[None, :, None]
             == jnp.arange(3)[:, None, None] + jnp.arange(W2)[None, None, :])
    wband = jnp.einsum('kpq,dhkio->dhpiqo', shift.astype(w.dtype),
                       w.reshape(3, 3, 3, Cin, Cout))
    wcat = wband.reshape(K, W2 * Cout).astype(jnp.bfloat16)

    brow = jnp.tile(b, W2).reshape(1, W2 * Cout).astype(jnp.float32)

    RH, RW = D * H2, W2 * Cout
    out2 = pl.pallas_call(
        _upsample_conv_kernel,
        out_shape=jax.ShapeDtypeStruct((RH, RW), jnp.float32),
        grid_spec=pltpu.PrefetchScalarGridSpec(
            num_scalar_prefetch=0,
            grid=(1,),
            in_specs=[
                pl.BlockSpec((RH, K), lambda i: (0, 0)),
                pl.BlockSpec((K, RW), lambda i: (0, 0)),
                pl.BlockSpec((1, RW), lambda i: (0, 0)),
            ],
            out_specs=pl.BlockSpec((RH, RW), lambda i: (0, 0)),
        ),
        compiler_params=pltpu.CompilerParams(
            dimension_semantics=("arbitrary",),
        ),
    )(xcat, wcat, brow)

    out = out2.reshape(D, H2, W2, Cout)                   # (d, h, w, cout)
    return jnp.transpose(out, (3, 0, 1, 2))               # (Cout, D, H2, W2)


# ----------------------------------------------------------------------------
# Pure-XLA reference (same math, no Pallas) for validation
# ----------------------------------------------------------------------------
def _reference_forward(w, b, x):
    A, C, H, W = x.shape
    y = jnp.concatenate([x, x, x, x], axis=1).reshape(A, C, 2, 2, H, W)
    y = jnp.transpose(y, (0, 1, 4, 2, 5, 3)).reshape(A, C, 2 * H, 2 * W)
    rhs = jnp.transpose(w, (4, 3, 0, 1, 2))               # (O, I, kd, kh, kw)
    out = jax.lax.conv_general_dilated(
        y[None], rhs, window_strides=(1, 1, 1), padding='SAME',
        dimension_numbers=('NCDHW', 'OIDHW', 'NCDHW'),
        precision=jax.lax.Precision.HIGHEST)
    return out[0] + b[:, None, None, None]


# ----------------------------------------------------------------------------
if __name__ == "__main__":
    input_dim, output_dim = 4, 4
    C, H, W = 4, 16, 16            # 4D test input (A=input_dim, C, H, W)

    key = jax.random.PRNGKey(0)
    kx, kw, kb = jax.random.split(key, 3)
    x = jax.random.normal(kx, (input_dim, C, H, W), jnp.float32)

    # nn.Conv3d default init: U(-1/sqrt(fan_in), 1/sqrt(fan_in)), fan_in = Cin*27
    bound = 1.0 / math.sqrt(input_dim * 27)
    w = jax.random.uniform(kw, (3, 3, 3, input_dim, output_dim),
                           jnp.float32, -bound, bound)
    b = jax.random.uniform(kb, (output_dim,), jnp.float32, -bound, bound)

    fwd = jax.jit(upsample_conv_forward)
    out = fwd(w, b, x)
    jax.block_until_ready(out)

    assert out.shape == (output_dim, C, 2 * H, 2 * W)
    assert bool(jnp.all(jnp.isfinite(out)))

    # bf16 operands on the MXU (f32 accumulate) vs f32 HIGHEST reference:
    # the 2e-2 tolerance is intentional headroom for that precision gap.
    ref = _reference_forward(w, b, x)
    np.testing.assert_allclose(np.asarray(out), np.asarray(ref),
                               rtol=2e-2, atol=2e-2)

    print("KERNEL_OK")
</pallas_src>

<mosaic_0001>
module attributes {stable_mosaic.version = 11 : i64} {
  func.func @_upsample_conv_kernel(%arg0: i32, %arg1: memref<128x1224xbf16, #tpu.memory_space<vmem>>, %arg2: memref<1224x128xbf16, #tpu.memory_space<vmem>>, %arg3: memref<1x128xf32, #tpu.memory_space<vmem>>, %arg4: memref<128x128xf32, #tpu.memory_space<vmem>>) attributes {dimension_semantics = [#tpu.dimension_semantics<arbitrary>], iteration_bounds = array<i64: 1>, scalar_prefetch = 0 : i64, scratch_operands = 0 : i64, tpu.core_type = #tpu.core_type<tc>, window_params = [{pipeline_mode = #tpu.pipeline_mode<synchronous>, transform_indices = @transform_0, window_bounds = array<i64: 128, 1224>}, {pipeline_mode = #tpu.pipeline_mode<synchronous>, transform_indices = @transform_1, window_bounds = array<i64: 1224, 128>}, {pipeline_mode = #tpu.pipeline_mode<synchronous>, transform_indices = @transform_2, window_bounds = array<i64: 1, 128>}, {pipeline_mode = #tpu.pipeline_mode<synchronous>, transform_indices = @transform_3, window_bounds = array<i64: 128, 128>}]} {
    %c0 = arith.constant 0 : index
    %c0_0 = arith.constant 0 : index
    %0 = vector.load %arg1[%c0, %c0_0] : memref<128x1224xbf16, #tpu.memory_space<vmem>>, vector<128x1224xbf16>
    %c0_1 = arith.constant 0 : index
    %c0_2 = arith.constant 0 : index
    %1 = vector.load %arg2[%c0_1, %c0_2] : memref<1224x128xbf16, #tpu.memory_space<vmem>>, vector<1224x128xbf16>
    %cst = arith.constant dense<0.000000e+00> : vector<128x128xf32>
    %2 = tpu.matmul %0, %1, %cst {dimension_numbers = #tpu.dot_dimension_numbers<[1], [0], [0], [1], [0, 0, 1, 1], [], []>} : vector<128x1224xbf16>, vector<1224x128xbf16>, vector<128x128xf32> -> vector<128x128xf32>
    %c0_3 = arith.constant 0 : index
    %c0_4 = arith.constant 0 : index
    %3 = vector.load %arg3[%c0_3, %c0_4] : memref<1x128xf32, #tpu.memory_space<vmem>>, vector<1x128xf32>
    %4 = vector.broadcast %3 : vector<1x128xf32> to vector<128x128xf32>
    %5 = arith.addf %2, %4 : vector<128x128xf32>
    %c0_5 = arith.constant 0 : index
    %c0_6 = arith.constant 0 : index
    %6 = vector.load %arg4[%c0_5, %c0_6] : memref<128x128xf32, #tpu.memory_space<vmem>>, vector<128x128xf32>
    tpu.vector_store %arg4[%c0_5, %c0_6], %5 {strides = array<i32>} : memref<128x128xf32, #tpu.memory_space<vmem>>, vector<128x128xf32>,
    return
  }
  func.func @transform_0(%arg0: i32) -> (i32, i32) {
    %c0_i32 = arith.constant 0 : i32
    %c0_i32_0 = arith.constant 0 : i32
    %c0_i32_1 = arith.constant 0 : i32
    return %c0_i32, %c0_i32_0 : i32, i32
  }
  func.func @transform_1(%arg0: i32) -> (i32, i32) {
    %c0_i32 = arith.constant 0 : i32
    %c0_i32_0 = arith.constant 0 : i32
    %c0_i32_1 = arith.constant 0 : i32
    return %c0_i32, %c0_i32_0 : i32, i32
  }
  func.func @transform_2(%arg0: i32) -> (i32, i32) {
    %c0_i32 = arith.constant 0 : i32
    %c0_i32_0 = arith.constant 0 : i32
    %c0_i32_1 = arith.constant 0 : i32
    return %c0_i32, %c0_i32_0 : i32, i32
  }
  func.func @transform_3(%arg0: i32) -> (i32, i32) {
    %c0_i32 = arith.constant 0 : i32
    %c0_i32_0 = arith.constant 0 : i32
    %c0_i32_1 = arith.constant 0 : i32
    return %c0_i32, %c0_i32_0 : i32, i32
  }
}

</mosaic_0001>

<llo_original>
// kernel: tile.8
$region0: #{tile.8}
  #allocation0 [shape = 's32[1]{0}', space=sflag, size = 0x4, scoped, tag = 'scoped memory for tile.8']
  %s0 = inlined_call_operand.vmem [shape: f32[4], index: 0, kind: input, shape index: {}]
  %s1 = inlined_call_operand.vmem [shape: f32[32,4], index: 1, kind: output, shape index: {}]
  // Predicated region
  $region2: #{tile.8} parent=0 // pred_check
    _
  $region3: #{tile.8} parent=0 // pred_check_branch
    %3 = sbr.rel (0) target = $region5
  $region4: #{tile.8} parent=0 // pred_region
    _
  $region5: #{tile.8} parent=0 // pred_fallthru
    _
  %v4 = vld [vmem:[%s0] ss:$0 sm:$0xff]
  %5 = vst [vmem:[%s1] sm:$0xff] %v4
  %s6 = scalar_lea.vmem %s1, 8
  %7 = vst [vmem:[%s6] sm:$0xff] %v4
  %s8 = scalar_lea.vmem %s1, 16
  %9 = vst [vmem:[%s8] sm:$0xff] %v4
  %s10 = scalar_lea.vmem %s1, 24
  %11 = vst [vmem:[%s10] sm:$0xff] %v4

// kernel: tile.9
$region0: #{tile.9}
  %s0 = inlined_call_operand.vmem [shape: f32[32,4], index: 0, kind: input, shape index: {}]
  %s1 = inlined_call_operand.vmem [shape: f32[1,128], index: 1, kind: output, shape index: {}]
  $region1: #{tile.9} parent=0
    #allocation0 [shape = 'u8[4096]{0}', space=vmem, size = 0x1000, scoped, tag = 'scoped mem for output reshape']
    %v2 = vld [vmem:[%s0] sm:$0x1]
    %vm3 = vcmask 31744
    %4 = vst.msk [vmem:[#allocation0] sm:$0x1] %vm3, %v2
    %s5 = scalar_lea.vmem %s0, 31
    %v6 = vld [vmem:[%s5] sm:$0x1]
    %7 = vrot.lane.b32.xlu0 %v6, 124
    %v8 = vpop.permute.xlu0 %7
    %vm9 = vcmask 1048544
    %10 = vst.msk [vmem:[#allocation0] sm:$0x1] %vm9, %v8
    %s11 = scalar_lea.vmem %s0, 30
    %v12 = vld [vmem:[%s11] sm:$0x1]
    %13 = vrot.lane.b32.xlu0 %v12, 120
    %v14 = vpop.permute.xlu0 %13
    %vm15 = vcmask 1015744
    %16 = vst.msk [vmem:[#allocation0] sm:$0x1] %vm15, %v14
    %s17 = scalar_lea.vmem %s0, 29
    %v18 = vld [vmem:[%s17] sm:$0x1]
    %19 = vrot.lane.b32.xlu0 %v18, 116
    %v20 = vpop.permute.xlu0 %19
    %vm21 = vcmask 982944
    %22 = vst.msk [vmem:[#allocation0] sm:$0x1] %vm21, %v20
    %s23 = scalar_lea.vmem %s0, 28
    %v24 = vld [vmem:[%s23] sm:$0x1]
    %25 = vrot.lane.b32.xlu0 %v24, 112
    %v26 = vpop.permute.xlu0 %25
    %vm27 = vcmask 950144
    %28 = vst.msk [vmem:[#allocation0] sm:$0x1] %vm27, %v26
    %s29 = scalar_lea.vmem %s0, 27
    %v30 = vld [vmem:[%s29] sm:$0x1]
    %31 = vrot.lane.b32.xlu0 %v30, 108
    %v32 = vpop.permute.xlu0 %31
    %vm33 = vcmask 917344
    %34 = vst.msk [vmem:[#allocation0] sm:$0x1] %vm33, %v32
    %s35 = scalar_lea.vmem %s0, 26
    %v36 = vld [vmem:[%s35] sm:$0x1]
    %37 = vrot.lane.b32.xlu0 %v36, 104
    %v38 = vpop.permute.xlu0 %37
    %vm39 = vcmask 884544
    %40 = vst.msk [vmem:[#allocation0] sm:$0x1] %vm39, %v38
    %s41 = scalar_lea.vmem %s0, 25
    %v42 = vld [vmem:[%s41] sm:$0x1]
    %43 = vrot.lane.b32.xlu0 %v42, 100
    %v44 = vpop.permute.xlu0 %43
    %vm45 = vcmask 851744
    %46 = vst.msk [vmem:[#allocation0] sm:$0x1] %vm45, %v44
    %s47 = scalar_lea.vmem %s0, 24
    %v48 = vld [vmem:[%s47] sm:$0x1]
    %49 = vrot.lane.b32.xlu0 %v48, 96
    %v50 = vpop.permute.xlu0 %49
    %vm51 = vcmask 818944
    %52 = vst.msk [vmem:[#allocation0] sm:$0x1] %vm51, %v50
    %s53 = scalar_lea.vmem %s0, 23
    %v54 = vld [vmem:[%s53] sm:$0x1]
    %55 = vrot.lane.b32.xlu0 %v54, 92
    %v56 = vpop.permute.xlu0 %55
    %vm57 = vcmask 786144
    %58 = vst.msk [vmem:[#allocation0] sm:$0x1] %vm57, %v56
    %s59 = scalar_lea.vmem %s0, 22
    %v60 = vld [vmem:[%s59] sm:$0x1]
    %61 = vrot.lane.b32.xlu0 %v60, 88
    %v62 = vpop.permute.xlu0 %61
    %vm63 = vcmask 753344
    %64 = vst.msk [vmem:[#allocation0] sm:$0x1] %vm63, %v62
    %s65 = scalar_lea.vmem %s0, 21
    %v66 = vld [vmem:[%s65] sm:$0x1]
    %67 = vrot.lane.b32.xlu0 %v66, 84
    %v68 = vpop.permute.xlu0 %67
    %vm69 = vcmask 720544
    %70 = vst.msk [vmem:[#allocation0] sm:$0x1] %vm69, %v68
    %s71 = scalar_lea.vmem %s0, 20
    %v72 = vld [vmem:[%s71] sm:$0x1]
    %73 = vrot.lane.b32.xlu0 %v72, 80
    %v74 = vpop.permute.xlu0 %73
    %vm75 = vcmask 687744
    %76 = vst.msk [vmem:[#allocation0] sm:$0x1] %vm75, %v74
    %s77 = scalar_lea.vmem %s0, 19
    %v78 = vld [vmem:[%s77] sm:$0x1]
    %79 = vrot.lane.b32.xlu0 %v78, 76
    %v80 = vpop.permute.xlu0 %79
    %vm81 = vcmask 654944
    %82 = vst.msk [vmem:[#allocation0] sm:$0x1] %vm81, %v80
    %s83 = scalar_lea.vmem %s0, 18
    %v84 = vld [vmem:[%s83] sm:$0x1]
    %85 = vrot.lane.b32.xlu0 %v84, 72
    %v86 = vpop.permute.xlu0 %85
    %vm87 = vcmask 622144
    %88 = vst.msk [vmem:[#allocation0] sm:$0x1] %vm87, %v86
    %s89 = scalar_lea.vmem %s0, 17
    %v90 = vld [vmem:[%s89] sm:$0x1]
    %91 = vrot.lane.b32.xlu0 %v90, 68
    %v92 = vpop.permute.xlu0 %91
    %vm93 = vcmask 589344
    %94 = vst.msk [vmem:[#allocation0] sm:$0x1] %vm93, %v92
    %s95 = scalar_lea.vmem %s0, 16
    %v96 = vld [vmem:[%s95] sm:$0x1]
    %97 = vrot.lane.b32.xlu0 %v96, 64
    %v98 = vpop.permute.xlu0 %97
    %vm99 = vcmask 556544
    %100 = vst.msk [vmem:[#allocation0] sm:$0x1] %vm99, %v98
    %s101 = scalar_lea.vmem %s0, 15
    %v102 = vld [vmem:[%s101] sm:$0x1]
    %103 = vrot.lane.b32.xlu0 %v102, 60
    %v104 = vpop.permute.xlu0 %103
    %vm105 = vcmask 523744
    %106 = vst.msk [vmem:[#allocation0] sm:$0x1] %vm105, %v104
    %s107 = scalar_lea.vmem %s0, 14
    %v108 = vld [vmem:[%s107] sm:$0x1]
    %109 = vrot.lane.b32.xlu0 %v108, 56
    %v110 = vpop.permute.xlu0 %109
    %vm111 = vcmask 490944
    %112 = vst.msk [vmem:[#allocation0] sm:$0x1] %vm111, %v110
    %s113 = scalar_lea.vmem %s0, 13
    %v114 = vld [vmem:[%s113] sm:$0x1]
    %115 = vrot.lane.b32.xlu0 %v114, 52
    %v116 = vpop.permute.xlu0 %115
    %vm117 = vcmask 458144
    %118 = vst.msk [vmem:[#allocation0] sm:$0x1] %vm117, %v116
    %s119 = scalar_lea.vmem %s0, 12
    %v120 = vld [vmem:[%s119] sm:$0x1]
    %121 = vrot.lane.b32.xlu0 %v120, 48
    %v122 = vpop.permute.xlu0 %121
    %vm123 = vcmask 425344
    %124 = vst.msk [vmem:[#allocation0] sm:$0x1] %vm123, %v122
    %s125 = scalar_lea.vmem %s0, 11
    %v126 = vld [vmem:[%s125] sm:$0x1]
    %127 = vrot.lane.b32.xlu0 %v126, 44
    %v128 = vpop.permute.xlu0 %127
    %vm129 = vcmask 392544
    %130 = vst.msk [vmem:[#allocation0] sm:$0x1] %vm129, %v128
    %s131 = scalar_lea.vmem %s0, 10
    %v132 = vld [vmem:[%s131] sm:$0x1]
    %133 = vrot.lane.b32.xlu0 %v132, 40
    %v134 = vpop.permute.xlu0 %133
    %vm135 = vcmask 359744
    %136 = vst.msk [vmem:[#allocation0] sm:$0x1] %vm135, %v134
    %s137 = scalar_lea.vmem %s0, 9
    %v138 = vld [vmem:[%s137] sm:$0x1]
    %139 = vrot.lane.b32.xlu0 %v138, 36
    %v140 = vpop.permute.xlu0 %139
    %vm141 = vcmask 326944
    %142 = vst.msk [vmem:[#allocation0] sm:$0x1] %vm141, %v140
    %s143 = scalar_lea.vmem %s0, 8
    %v144 = vld [vmem:[%s143] sm:$0x1]
    %145 = vrot.lane.b32.xlu0 %v144, 32
    %v146 = vpop.permute.xlu0 %145
    %vm147 = vcmask 294144
    %148 = vst.msk [vmem:[#allocation0] sm:$0x1] %vm147, %v146
    %s149 = scalar_lea.vmem %s0, 7
    %v150 = vld [vmem:[%s149] sm:$0x1]
    %151 = vrot.lane.b32.xlu0 %v150, 28
    %v152 = vpop.permute.xlu0 %151
    %vm153 = vcmask 261344
    %154 = vst.msk [vmem:[#allocation0] sm:$0x1] %vm153, %v152
    %s155 = scalar_lea.vmem %s0, 6
    %v156 = vld [vmem:[%s155] sm:$0x1]
    %157 = vrot.lane.b32.xlu0 %v156, 24
    %v158 = vpop.permute.xlu0 %157
    %vm159 = vcmask 228544
    %160 = vst.msk [vmem:[#allocation0] sm:$0x1] %vm159, %v158
    %s161 = scalar_lea.vmem %s0, 5
    %v162 = vld [vmem:[%s161] sm:$0x1]
    %163 = vrot.lane.b32.xlu0 %v162, 20
    %v164 = vpop.permute.xlu0 %163
    %vm165 = vcmask 195744
    %166 = vst.msk [vmem:[#allocation0] sm:$0x1] %vm165, %v164
    %s167 = scalar_lea.vmem %s0, 4
    %v168 = vld [vmem:[%s167] sm:$0x1]
    %169 = vrot.lane.b32.xlu0 %v168, 16
    %v170 = vpop.permute.xlu0 %169
    %vm171 = vcmask 162944
    %172 = vst.msk [vmem:[#allocation0] sm:$0x1] %vm171, %v170
    %s173 = scalar_lea.vmem %s0, 3
    %v174 = vld [vmem:[%s173] sm:$0x1]
    %175 = vrot.lane.b32.xlu0 %v174, 12
    %v176 = vpop.permute.xlu0 %175
    %vm177 = vcmask 130144
    %178 = vst.msk [vmem:[#allocation0] sm:$0x1] %vm177, %v176
    %s179 = scalar_lea.vmem %s0, 2
    %v180 = vld [vmem:[%s179] sm:$0x1]
    %181 = vrot.lane.b32.xlu0 %v180, 8
    %v182 = vpop.permute.xlu0 %181
    %vm183 = vcmask 97344
    %184 = vst.msk [vmem:[#allocation0] sm:$0x1] %vm183, %v182
    %s185 = scalar_lea.vmem %s0, 1
    %v186 = vld [vmem:[%s185] sm:$0x1]
    %187 = vrot.lane.b32.xlu0 %v186, 4
    %v188 = vpop.permute.xlu0 %187
    %vm189 = vcmask 64544
    %190 = vst.msk [vmem:[#allocation0] sm:$0x1] %vm189, %v188
    %s192 = sshllo.u32 0, 1
    %v194 = vld [vmem:[#allocation0] sm:%s192]
    %s195 = sshllo.u32 0, 1
    %196 = vst [vmem:[%s1] sm:%s195] %v194

// kernel: upsample_conv_forward.1
$region0: #{upsample_conv_forward.1}
  #allocation0 [shape = 'u32[]', space=smem, size = 0x4, offset = 0x4, fixed_abs, tag = 'smem constant byte address 0x4 - core index']
  #allocation1 [shape = 'u32[144,128]{1,0:T(1,128)}', space=vmem, size = 0x12000, scoped, tag = 'internal scratch']
  %s0 = inlined_call_operand.vmem [shape: bf16[128,1224], index: 0, kind: input, shape index: {}]
  %s1 = inlined_call_operand.vmem [shape: bf16[1224,128], index: 1, kind: input, shape index: {}]
  %s2 = inlined_call_operand.vmem [shape: f32[1,128], index: 2, kind: input, shape index: {}]
  %s3 = inlined_call_operand.vmem [shape: f32[128,128], index: 3, kind: output, shape index: {}]
  %s4 = sld [smem:[#allocation0]]
  $region22: #{upsample_conv_forward.1} parent=0
    _
  %s6 = ssub.s32 1, %s4
  %s7 = scalar_select 0, %s6, %s4
  // Predicated region
  $region2: #{upsample_conv_forward.1} parent=0 // pred_check
    _
  $region3: #{upsample_conv_forward.1} parent=0 // pred_check_branch
    %9 = sbr.rel (0) target = $region5
  $region4: #{upsample_conv_forward.1} parent=0 // pred_region
    _
  $region5: #{upsample_conv_forward.1} parent=0 // pred_fallthru
    _
  // Predicated region
  $region6: #{upsample_conv_forward.1} parent=0 // pred_check
    _
  $region7: #{upsample_conv_forward.1} parent=0 // pred_check_branch
    %11 = sbr.rel (0) target = $region9
  $region8: #{upsample_conv_forward.1} parent=0 // pred_region
    _
  $region9: #{upsample_conv_forward.1} parent=0 // pred_fallthru
    _
  // Predicated region
  $region10: #{upsample_conv_forward.1} parent=0 // pred_check
    _
  $region11: #{upsample_conv_forward.1} parent=0 // pred_check_branch
    %13 = sbr.rel (0) target = $region13
  $region12: #{upsample_conv_forward.1} parent=0 // pred_region
    _
  $region13: #{upsample_conv_forward.1} parent=0 // pred_fallthru
    _
  %v15 = vld [vmem:[%s0] sm:$0xff]
  %v16 = vld [vmem:[%s0 + $0x8] sm:$0xff]
  %v17 = vld [vmem:[%s0 + $0x10] sm:$0xff]
  %v18 = vld [vmem:[%s0 + $0x18] sm:$0xff]
  %v19 = vld [vmem:[%s0 + $0x20] sm:$0xff]
  %v20 = vld [vmem:[%s0 + $0x28] sm:$0xff]
  %v21 = vld [vmem:[%s0 + $0x30] sm:$0xff]
  %v22 = vld [vmem:[%s0 + $0x38] sm:$0xff]
  %v23 = vld [vmem:[%s0 + $0x40] sm:$0xff]
  %v24 = vld [vmem:[%s0 + $0x48] sm:$0xff]
  %v25 = vld [vmem:[%s0 + $0x50] sm:$0xff]
  %v26 = vld [vmem:[%s0 + $0x58] sm:$0xff]
  %v27 = vld [vmem:[%s0 + $0x60] sm:$0xff]
  %v28 = vld [vmem:[%s0 + $0x68] sm:$0xff]
  %v29 = vld [vmem:[%s0 + $0x70] sm:$0xff]
  %v30 = vld [vmem:[%s0 + $0x78] sm:$0xff]
  %v31 = vld [vmem:[%s0 + $0x80] sm:$0xff]
  %v32 = vld [vmem:[%s0 + $0x88] sm:$0xff]
  %v33 = vld [vmem:[%s0 + $0x90] sm:$0xff]
  %v34 = vld [vmem:[%s0 + $0x98] sm:$0xff]
  %v35 = vld [vmem:[%s0 + $0xa0] sm:$0xff]
  %v36 = vld [vmem:[%s0 + $0xa8] sm:$0xff]
  %v37 = vld [vmem:[%s0 + $0xb0] sm:$0xff]
  %v38 = vld [vmem:[%s0 + $0xb8] sm:$0xff]
  %v39 = vld [vmem:[%s0 + $0xc0] sm:$0xff]
  %v40 = vld [vmem:[%s0 + $0xc8] sm:$0xff]
  %v41 = vld [vmem:[%s0 + $0xd0] sm:$0xff]
  %v42 = vld [vmem:[%s0 + $0xd8] sm:$0xff]
  %v43 = vld [vmem:[%s0 + $0xe0] sm:$0xff]
  %v44 = vld [vmem:[%s0 + $0xe8] sm:$0xff]
  %v45 = vld [vmem:[%s0 + $0xf0] sm:$0xff]
  %v46 = vld [vmem:[%s0 + $0xf8] sm:$0xff]
  %v47 = vld [vmem:[%s0 + $0x100] sm:$0xff]
  %v48 = vld [vmem:[%s0 + $0x108] sm:$0xff]
  %v49 = vld [vmem:[%s0 + $0x110] sm:$0xff]
  %v50 = vld [vmem:[%s0 + $0x118] sm:$0xff]
  %v51 = vld [vmem:[%s0 + $0x120] sm:$0xff]
  %v52 = vld [vmem:[%s0 + $0x128] sm:$0xff]
  %v53 = vld [vmem:[%s0 + $0x130] sm:$0xff]
  %v54 = vld [vmem:[%s0 + $0x138] sm:$0xff]
  %v55 = vld [vmem:[%s0 + $0x140] sm:$0xff]
  %v56 = vld [vmem:[%s0 + $0x148] sm:$0xff]
  %v57 = vld [vmem:[%s0 + $0x150] sm:$0xff]
  %v58 = vld [vmem:[%s0 + $0x158] sm:$0xff]
  %v59 = vld [vmem:[%s0 + $0x160] sm:$0xff]
  %v60 = vld [vmem:[%s0 + $0x168] sm:$0xff]
  %v61 = vld [vmem:[%s0 + $0x170] sm:$0xff]
  %v62 = vld [vmem:[%s0 + $0x178] sm:$0xff]
  %v63 = vld [vmem:[%s0 + $0x180] sm:$0xff]
  %v64 = vld [vmem:[%s0 + $0x188] sm:$0xff]
  %v65 = vld [vmem:[%s0 + $0x190] sm:$0xff]
  %v66 = vld [vmem:[%s0 + $0x198] sm:$0xff]
  %v67 = vld [vmem:[%s0 + $0x1a0] sm:$0xff]
  %v68 = vld [vmem:[%s0 + $0x1a8] sm:$0xff]
  %v69 = vld [vmem:[%s0 + $0x1b0] sm:$0xff]
  %v70 = vld [vmem:[%s0 + $0x1b8] sm:$0xff]
  %v71 = vld [vmem:[%s0 + $0x1c0] sm:$0xff]
  %v72 = vld [vmem:[%s0 + $0x1c8] sm:$0xff]
  %v73 = vld [vmem:[%s0 + $0x1d0] sm:$0xff]
  %v74 = vld [vmem:[%s0 + $0x1d8] sm:$0xff]
  %v75 = vld [vmem:[%s0 + $0x1e0] sm:$0xff]
  %v76 = vld [vmem:[%s0 + $0x1e8] sm:$0xff]
  %v77 = vld [vmem:[%s0 + $0x1f0] sm:$0xff]
  %v78 = vld [vmem:[%s0 + $0x1f8] sm:$0xff]
  %v79 = vld [vmem:[%s0 + $0x200] sm:$0xff]
  %v80 = vld [vmem:[%s0 + $0x208] sm:$0xff]
  %v81 = vld [vmem:[%s0 + $0x210] sm:$0xff]
  %v82 = vld [vmem:[%s0 + $0x218] sm:$0xff]
  %v83 = vld [vmem:[%s0 + $0x220] sm:$0xff]
  %v84 = vld [vmem:[%s0 + $0x228] sm:$0xff]
  %v85 = vld [vmem:[%s0 + $0x230] sm:$0xff]
  %v86 = vld [vmem:[%s0 + $0x238] sm:$0xff]
  %v87 = vld [vmem:[%s0 + $0x240] sm:$0xff]
  %v88 = vld [vmem:[%s0 + $0x248] sm:$0xff]
  %v89 = vld [vmem:[%s0 + $0x250] sm:$0xff]
  %v90 = vld [vmem:[%s0 + $0x258] sm:$0xff]
  %v91 = vld [vmem:[%s0 + $0x260] sm:$0xff]
  %v92 = vld [vmem:[%s0 + $0x268] sm:$0xff]
  %v93 = vld [vmem:[%s0 + $0x270] sm:$0xff]
  %v94 = vld [vmem:[%s0 + $0x278] sm:$0xff]
  %v95 = vld [vmem:[%s1] sm:$0xf]
  %v96 = vld [vmem:[%s1 + $0x4] sm:$0xf]
  %v97 = vld [vmem:[%s1 + $0x8] sm:$0xf]
  %v98 = vld [vmem:[%s1 + $0xc] sm:$0xf]
  %v99 = vld [vmem:[%s1 + $0x10] sm:$0xf]
  %v100 = vld [vmem:[%s1 + $0x14] sm:$0xf]
  %v101 = vld [vmem:[%s1 + $0x18] sm:$0xf]
  %v102 = vld [vmem:[%s1 + $0x1c] sm:$0xf]
  %v103 = vld [vmem:[%s1 + $0x20] sm:$0xf]
  %v104 = vld [vmem:[%s1 + $0x24] sm:$0xf]
  %v105 = vld [vmem:[%s1 + $0x28] sm:$0xf]
  %v106 = vld [vmem:[%s1 + $0x2c] sm:$0xf]
  %v107 = vld [vmem:[%s1 + $0x30] sm:$0xf]
  %v108 = vld [vmem:[%s1 + $0x34] sm:$0xf]
  %v109 = vld [vmem:[%s1 + $0x38] sm:$0xf]
  %v110 = vld [vmem:[%s1 + $0x3c] sm:$0xf]
  %v111 = vld [vmem:[%s1 + $0x40] sm:$0xf]
  %v112 = vld [vmem:[%s1 + $0x44] sm:$0xf]
  %v113 = vld [vmem:[%s1 + $0x48] sm:$0xf]
  %v114 = vld [vmem:[%s1 + $0x4c] sm:$0xf]
  %v115 = vld [vmem:[%s1 + $0x50] sm:$0xf]
  %v116 = vld [vmem:[%s1 + $0x54] sm:$0xf]
  %v117 = vld [vmem:[%s1 + $0x58] sm:$0xf]
  %v118 = vld [vmem:[%s1 + $0x5c] sm:$0xf]
  %v119 = vld [vmem:[%s1 + $0x60] sm:$0xf]
  %v120 = vld [vmem:[%s1 + $0x64] sm:$0xf]
  %v121 = vld [vmem:[%s1 + $0x68] sm:$0xf]
  %v122 = vld [vmem:[%s1 + $0x6c] sm:$0xf]
  %v123 = vld [vmem:[%s1 + $0x70] sm:$0xf]
  %v124 = vld [vmem:[%s1 + $0x74] sm:$0xf]
  %v125 = vld [vmem:[%s1 + $0x78] sm:$0xf]
  %v126 = vld [vmem:[%s1 + $0x7c] sm:$0xf]
  %v127 = vld [vmem:[%s1 + $0x80] sm:$0xf]
  %v128 = vld [vmem:[%s1 + $0x84] sm:$0xf]
  %v129 = vld [vmem:[%s1 + $0x88] sm:$0xf]
  %v130 = vld [vmem:[%s1 + $0x8c] sm:$0xf]
  %v131 = vld [vmem:[%s1 + $0x90] sm:$0xf]
  %v132 = vld [vmem:[%s1 + $0x94] sm:$0xf]
  %v133 = vld [vmem:[%s1 + $0x98] sm:$0xf]
  %v134 = vld [vmem:[%s1 + $0x9c] sm:$0xf]
  %v135 = vld [vmem:[%s1 + $0xa0] sm:$0xf]
  %v136 = vld [vmem:[%s1 + $0xa4] sm:$0xf]
  %v137 = vld [vmem:[%s1 + $0xa8] sm:$0xf]
  %v138 = vld [vmem:[%s1 + $0xac] sm:$0xf]
  %v139 = vld [vmem:[%s1 + $0xb0] sm:$0xf]
  %v140 = vld [vmem:[%s1 + $0xb4] sm:$0xf]
  %v141 = vld [vmem:[%s1 + $0xb8] sm:$0xf]
  %v142 = vld [vmem:[%s1 + $0xbc] sm:$0xf]
  %v143 = vld [vmem:[%s1 + $0xc0] sm:$0xf]
  %v144 = vld [vmem:[%s1 + $0xc4] sm:$0xf]
  %v145 = vld [vmem:[%s1 + $0xc8] sm:$0xf]
  %v146 = vld [vmem:[%s1 + $0xcc] sm:$0xf]
  %v147 = vld [vmem:[%s1 + $0xd0] sm:$0xf]
  %v148 = vld [vmem:[%s1 + $0xd4] sm:$0xf]
  %v149 = vld [vmem:[%s1 + $0xd8] sm:$0xf]
  %v150 = vld [vmem:[%s1 + $0xdc] sm:$0xf]
  %v151 = vld [vmem:[%s1 + $0xe0] sm:$0xf]
  %v152 = vld [vmem:[%s1 + $0xe4] sm:$0xf]
  %v153 = vld [vmem:[%s1 + $0xe8] sm:$0xf]
  %v154 = vld [vmem:[%s1 + $0xec] sm:$0xf]
  %v155 = vld [vmem:[%s1 + $0xf0] sm:$0xf]
  %v156 = vld [vmem:[%s1 + $0xf4] sm:$0xf]
  %v157 = vld [vmem:[%s1 + $0xf8] sm:$0xf]
  %v158 = vld [vmem:[%s1 + $0xfc] sm:$0xf]
  %v159 = vld [vmem:[%s1 + $0x100] sm:$0xf]
  %v160 = vld [vmem:[%s1 + $0x104] sm:$0xf]
  %v161 = vld [vmem:[%s1 + $0x108] sm:$0xf]
  %v162 = vld [vmem:[%s1 + $0x10c] sm:$0xf]
  %v163 = vld [vmem:[%s1 + $0x110] sm:$0xf]
  %v164 = vld [vmem:[%s1 + $0x114] sm:$0xf]
  %v165 = vld [vmem:[%s1 + $0x118] sm:$0xf]
  %v166 = vld [vmem:[%s1 + $0x11c] sm:$0xf]
  %v167 = vld [vmem:[%s1 + $0x120] sm:$0xf]
  %v168 = vld [vmem:[%s1 + $0x124] sm:$0xf]
  %v169 = vld [vmem:[%s1 + $0x128] sm:$0xf]
  %v170 = vld [vmem:[%s1 + $0x12c] sm:$0xf]
  %v171 = vld [vmem:[%s1 + $0x130] sm:$0xf]
  %v172 = vld [vmem:[%s1 + $0x134] sm:$0xf]
  %v173 = vld [vmem:[%s1 + $0x138] sm:$0xf]
  %v174 = vld [vmem:[%s1 + $0x13c] sm:$0xf]
  %v175 = vld [vmem:[%s1 + $0x140] sm:$0xf]
  %v176 = vld [vmem:[%s1 + $0x144] sm:$0xf]
  %v177 = vld [vmem:[%s1 + $0x148] sm:$0xf]
  %v178 = vld [vmem:[%s1 + $0x14c] sm:$0xf]
  %v179 = vld [vmem:[%s1 + $0x150] sm:$0xf]
  %v180 = vld [vmem:[%s1 + $0x154] sm:$0xf]
  %v181 = vld [vmem:[%s1 + $0x158] sm:$0xf]
  %v182 = vld [vmem:[%s1 + $0x15c] sm:$0xf]
  %v183 = vld [vmem:[%s1 + $0x160] sm:$0xf]
  %v184 = vld [vmem:[%s1 + $0x164] sm:$0xf]
  %v185 = vld [vmem:[%s1 + $0x168] sm:$0xf]
  %v186 = vld [vmem:[%s1 + $0x16c] sm:$0xf]
  %v187 = vld [vmem:[%s1 + $0x170] sm:$0xf]
  %v188 = vld [vmem:[%s1 + $0x174] sm:$0xf]
  %v189 = vld [vmem:[%s1 + $0x178] sm:$0xf]
  %v190 = vld [vmem:[%s1 + $0x17c] sm:$0xf]
  %v191 = vld [vmem:[%s1 + $0x180] sm:$0xf]
  %v192 = vld [vmem:[%s1 + $0x184] sm:$0xf]
  %v193 = vld [vmem:[%s1 + $0x188] sm:$0xf]
  %v194 = vld [vmem:[%s1 + $0x18c] sm:$0xf]
  %v195 = vld [vmem:[%s1 + $0x190] sm:$0xf]
  %v196 = vld [vmem:[%s1 + $0x194] sm:$0xf]
  %v197 = vld [vmem:[%s1 + $0x198] sm:$0xf]
  %v198 = vld [vmem:[%s1 + $0x19c] sm:$0xf]
  %v199 = vld [vmem:[%s1 + $0x1a0] sm:$0xf]
  %v200 = vld [vmem:[%s1 + $0x1a4] sm:$0xf]
  %v201 = vld [vmem:[%s1 + $0x1a8] sm:$0xf]
  %v202 = vld [vmem:[%s1 + $0x1ac] sm:$0xf]
  %v203 = vld [vmem:[%s1 + $0x1b0] sm:$0xf]
  %v204 = vld [vmem:[%s1 + $0x1b4] sm:$0xf]
  %v205 = vld [vmem:[%s1 + $0x1b8] sm:$0xf]
  %v206 = vld [vmem:[%s1 + $0x1bc] sm:$0xf]
  %v207 = vld [vmem:[%s1 + $0x1c0] sm:$0xf]
  %v208 = vld [vmem:[%s1 + $0x1c4] sm:$0xf]
  %v209 = vld [vmem:[%s1 + $0x1c8] sm:$0xf]
  %v210 = vld [vmem:[%s1 + $0x1cc] sm:$0xf]
  %v211 = vld [vmem:[%s1 + $0x1d0] sm:$0xf]
  %v212 = vld [vmem:[%s1 + $0x1d4] sm:$0xf]
  %v213 = vld [vmem:[%s1 + $0x1d8] sm:$0xf]
  %v214 = vld [vmem:[%s1 + $0x1dc] sm:$0xf]
  %v215 = vld [vmem:[%s1 + $0x1e0] sm:$0xf]
  %v216 = vld [vmem:[%s1 + $0x1e4] sm:$0xf]
  %v217 = vld [vmem:[%s1 + $0x1e8] sm:$0xf]
  %v218 = vld [vmem:[%s1 + $0x1ec] sm:$0xf]
  %v219 = vld [vmem:[%s1 + $0x1f0] sm:$0xf]
  %v220 = vld [vmem:[%s1 + $0x1f4] sm:$0xf]
  %v221 = vld [vmem:[%s1 + $0x1f8] sm:$0xf]
  %v222 = vld [vmem:[%s1 + $0x1fc] sm:$0xf]
  %v223 = vld [vmem:[%s1 + $0x200] sm:$0xf]
  %v224 = vld [vmem:[%s1 + $0x204] sm:$0xf]
  %v225 = vld [vmem:[%s1 + $0x208] sm:$0xf]
  %v226 = vld [vmem:[%s1 + $0x20c] sm:$0xf]
  %v227 = vld [vmem:[%s1 + $0x210] sm:$0xf]
  %v228 = vld [vmem:[%s1 + $0x214] sm:$0xf]
  %v229 = vld [vmem:[%s1 + $0x218] sm:$0xf]
  %v230 = vld [vmem:[%s1 + $0x21c] sm:$0xf]
  %v231 = vld [vmem:[%s1 + $0x220] sm:$0xf]
  %v232 = vld [vmem:[%s1 + $0x224] sm:$0xf]
  %v233 = vld [vmem:[%s1 + $0x228] sm:$0xf]
  %v234 = vld [vmem:[%s1 + $0x22c] sm:$0xf]
  %v235 = vld [vmem:[%s1 + $0x230] sm:$0xf]
  %v236 = vld [vmem:[%s1 + $0x234] sm:$0xf]
  %v237 = vld [vmem:[%s1 + $0x238] sm:$0xf]
  %v238 = vld [vmem:[%s1 + $0x23c] sm:$0xf]
  %v239 = vld [vmem:[%s1 + $0x240] sm:$0xf]
  %v240 = vld [vmem:[%s1 + $0x244] sm:$0xf]
  %v241 = vld [vmem:[%s1 + $0x248] sm:$0xf]
  %v242 = vld [vmem:[%s1 + $0x24c] sm:$0xf]
  %v243 = vld [vmem:[%s1 + $0x250] sm:$0xf]
  %v244 = vld [vmem:[%s1 + $0x254] sm:$0xf]
  %v245 = vld [vmem:[%s1 + $0x258] sm:$0xf]
  %v246 = vld [vmem:[%s1 + $0x25c] sm:$0xf]
  %v247 = vld [vmem:[%s1 + $0x260] sm:$0xf]
  %v248 = vld [vmem:[%s2] sm:$0x1]
  %v250 = vlaneseq
  %v251 = vshrl.u32 %v250, 7
  %v252 = vsub.s32 0, %v251
  %v253 = vrot.slane %v248, %v252
  %v335 = vunpack.c.l.b16 %v15
  %v336 = vunpack.c.h.b16 %v15
  %v337 = vunpack.c.l.b16 %v16
  %v338 = vunpack.c.h.b16 %v16
  %v339 = vunpack.c.l.b16 %v17
  %v340 = vunpack.c.h.b16 %v17
  %v341 = vunpack.c.l.b16 %v18
  %v342 = vunpack.c.h.b16 %v18
  %v343 = vunpack.c.l.b16 %v19
  %v344 = vunpack.c.h.b16 %v19
  %v345 = vunpack.c.l.b16 %v20
  %v346 = vunpack.c.h.b16 %v20
  %v347 = vunpack.c.l.b16 %v21
  %v348 = vunpack.c.h.b16 %v21
  %v349 = vunpack.c.l.b16 %v22
  %v350 = vunpack.c.h.b16 %v22
  %v351 = vunpack.c.l.b16 %v23
  %v352 = vunpack.c.h.b16 %v23
  %v353 = vunpack.c.l.b16 %v24
  %v354 = vunpack.c.h.b16 %v24
  %v355 = vunpack.c.l.b16 %v25
  %v356 = vunpack.c.h.b16 %v25
  %v357 = vunpack.c.l.b16 %v26
  %v358 = vunpack.c.h.b16 %v26
  %v359 = vunpack.c.l.b16 %v27
  %v360 = vunpack.c.h.b16 %v27
  %v361 = vunpack.c.l.b16 %v28
  %v362 = vunpack.c.h.b16 %v28
  %v363 = vunpack.c.l.b16 %v29
  %v364 = vunpack.c.h.b16 %v29
  %v365 = vunpack.c.l.b16 %v30
  %v366 = vunpack.c.h.b16 %v30
  %v367 = vunpack.c.l.b16 %v31
  %v368 = vunpack.c.h.b16 %v31
  %v369 = vunpack.c.l.b16 %v32
  %v370 = vunpack.c.h.b16 %v32
  %v371 = vunpack.c.l.b16 %v33
  %v372 = vunpack.c.h.b16 %v33
  %v373 = vunpack.c.l.b16 %v34
  %v374 = vunpack.c.h.b16 %v34
  %v375 = vunpack.c.l.b16 %v35
  %v376 = vunpack.c.h.b16 %v35
  %v377 = vunpack.c.l.b16 %v36
  %v378 = vunpack.c.h.b16 %v36
  %v379 = vunpack.c.l.b16 %v37
  %v380 = vunpack.c.h.b16 %v37
  %v381 = vunpack.c.l.b16 %v38
  %v382 = vunpack.c.h.b16 %v38
  %v383 = vunpack.c.l.b16 %v39
  %v384 = vunpack.c.h.b16 %v39
  %v385 = vunpack.c.l.b16 %v40
  %v386 = vunpack.c.h.b16 %v40
  %v387 = vunpack.c.l.b16 %v41
  %v388 = vunpack.c.h.b16 %v41
  %v389 = vunpack.c.l.b16 %v42
  %v390 = vunpack.c.h.b16 %v42
  %v391 = vunpack.c.l.b16 %v43
  %v392 = vunpack.c.h.b16 %v43
  %v393 = vunpack.c.l.b16 %v44
  %v394 = vunpack.c.h.b16 %v44
  %v395 = vunpack.c.l.b16 %v45
  %v396 = vunpack.c.h.b16 %v45
  %v397 = vunpack.c.l.b16 %v46
  %v398 = vunpack.c.h.b16 %v46
  %v399 = vunpack.c.l.b16 %v47
  %v400 = vunpack.c.h.b16 %v47
  %v401 = vunpack.c.l.b16 %v48
  %v402 = vunpack.c.h.b16 %v48
  %v403 = vunpack.c.l.b16 %v49
  %v404 = vunpack.c.h.b16 %v49
  %v405 = vunpack.c.l.b16 %v50
  %v406 = vunpack.c.h.b16 %v50
  %v407 = vunpack.c.l.b16 %v51
  %v408 = vunpack.c.h.b16 %v51
  %v409 = vunpack.c.l.b16 %v52
  %v410 = vunpack.c.h.b16 %v52
  %v411 = vunpack.c.l.b16 %v53
  %v412 = vunpack.c.h.b16 %v53
  %v413 = vunpack.c.l.b16 %v54
  %v414 = vunpack.c.h.b16 %v54
  %v415 = vunpack.c.l.b16 %v55
  %v416 = vunpack.c.h.b16 %v55
  %v417 = vunpack.c.l.b16 %v56
  %v418 = vunpack.c.h.b16 %v56
  %v419 = vunpack.c.l.b16 %v57
  %v420 = vunpack.c.h.b16 %v57
  %v421 = vunpack.c.l.b16 %v58
  %v422 = vunpack.c.h.b16 %v58
  %v423 = vunpack.c.l.b16 %v59
  %v424 = vunpack.c.h.b16 %v59
  %v425 = vunpack.c.l.b16 %v60
  %v426 = vunpack.c.h.b16 %v60
  %v427 = vunpack.c.l.b16 %v61
  %v428 = vunpack.c.h.b16 %v61
  %v429 = vunpack.c.l.b16 %v62
  %v430 = vunpack.c.h.b16 %v62
  %v431 = vunpack.c.l.b16 %v63
  %v432 = vunpack.c.h.b16 %v63
  %v433 = vunpack.c.l.b16 %v64
  %v434 = vunpack.c.h.b16 %v64
  %v435 = vunpack.c.l.b16 %v65
  %v436 = vunpack.c.h.b16 %v65
  %v437 = vunpack.c.l.b16 %v66
  %v438 = vunpack.c.h.b16 %v66
  %v439 = vunpack.c.l.b16 %v67
  %v440 = vunpack.c.h.b16 %v67
  %v441 = vunpack.c.l.b16 %v68
  %v442 = vunpack.c.h.b16 %v68
  %v443 = vunpack.c.l.b16 %v69
  %v444 = vunpack.c.h.b16 %v69
  %v445 = vunpack.c.l.b16 %v70
  %v446 = vunpack.c.h.b16 %v70
  %v447 = vunpack.c.l.b16 %v71
  %v448 = vunpack.c.h.b16 %v71
  %v449 = vunpack.c.l.b16 %v72
  %v450 = vunpack.c.h.b16 %v72
  %v451 = vunpack.c.l.b16 %v73
  %v452 = vunpack.c.h.b16 %v73
  %v453 = vunpack.c.l.b16 %v74
  %v454 = vunpack.c.h.b16 %v74
  %v455 = vunpack.c.l.b16 %v75
  %v456 = vunpack.c.h.b16 %v75
  %v457 = vunpack.c.l.b16 %v76
  %v458 = vunpack.c.h.b16 %v76
  %v459 = vunpack.c.l.b16 %v77
  %v460 = vunpack.c.h.b16 %v77
  %v461 = vunpack.c.l.b16 %v78
  %v462 = vunpack.c.h.b16 %v78
  %v463 = vunpack.c.l.b16 %v79
  %v464 = vunpack.c.h.b16 %v79
  %v465 = vunpack.c.l.b16 %v80
  %v466 = vunpack.c.h.b16 %v80
  %v467 = vunpack.c.l.b16 %v81
  %v468 = vunpack.c.h.b16 %v81
  %v469 = vunpack.c.l.b16 %v82
  %v470 = vunpack.c.h.b16 %v82
  %v471 = vunpack.c.l.b16 %v83
  %v472 = vunpack.c.h.b16 %v83
  %v473 = vunpack.c.l.b16 %v84
  %v474 = vunpack.c.h.b16 %v84
  %v475 = vunpack.c.l.b16 %v85
  %v476 = vunpack.c.h.b16 %v85
  %v477 = vunpack.c.l.b16 %v86
  %v478 = vunpack.c.h.b16 %v86
  %v479 = vunpack.c.l.b16 %v87
  %v480 = vunpack.c.h.b16 %v87
  %v481 = vunpack.c.l.b16 %v88
  %v482 = vunpack.c.h.b16 %v88
  %v483 = vunpack.c.l.b16 %v89
  %v484 = vunpack.c.h.b16 %v89
  %v485 = vunpack.c.l.b16 %v90
  %v486 = vunpack.c.h.b16 %v90
  %v487 = vunpack.c.l.b16 %v91
  %v488 = vunpack.c.h.b16 %v91
  %v489 = vunpack.c.l.b16 %v92
  %v490 = vunpack.c.h.b16 %v92
  %v491 = vunpack.c.l.b16 %v93
  %v492 = vunpack.c.h.b16 %v93
  %v493 = vunpack.c.l.b16 %v94
  %v494 = vunpack.c.h.b16 %v94
  %v495 = vpack.c.b16 %v345, %v335
  %v496 = vpack.c.b16 %v346, %v336
  %v497 = vpack.c.b16 %v347, %v337
  %v498 = vpack.c.b16 %v348, %v338
  %v499 = vpack.c.b16 %v349, %v339
  %v500 = vpack.c.b16 %v350, %v340
  %v501 = vpack.c.b16 %v351, %v341
  %v502 = vpack.c.b16 %v352, %v342
  %v503 = vpack.c.b16 %v353, %v343
  %v504 = vpack.c.b16 %v354, %v344
  %v505 = vpack.c.b16 %v365, %v355
  %v506 = vpack.c.b16 %v366, %v356
  %v507 = vpack.c.b16 %v367, %v357
  %v508 = vpack.c.b16 %v368, %v358
  %v509 = vpack.c.b16 %v369, %v359
  %v510 = vpack.c.b16 %v370, %v360
  %v511 = vpack.c.b16 %v371, %v361
  %v512 = vpack.c.b16 %v372, %v362
  %v513 = vpack.c.b16 %v373, %v363
  %v514 = vpack.c.b16 %v374, %v364
  %v515 = vpack.c.b16 %v385, %v375
  %v516 = vpack.c.b16 %v386, %v376
  %v517 = vpack.c.b16 %v387, %v377
  %v518 = vpack.c.b16 %v388, %v378
  %v519 = vpack.c.b16 %v389, %v379
  %v520 = vpack.c.b16 %v390, %v380
  %v521 = vpack.c.b16 %v391, %v381
  %v522 = vpack.c.b16 %v392, %v382
  %v523 = vpack.c.b16 %v393, %v383
  %v524 = vpack.c.b16 %v394, %v384
  %v525 = vpack.c.b16 %v405, %v395
  %v526 = vpack.c.b16 %v406, %v396
  %v527 = vpack.c.b16 %v407, %v397
  %v528 = vpack.c.b16 %v408, %v398
  %v529 = vpack.c.b16 %v409, %v399
  %v530 = vpack.c.b16 %v410, %v400
  %v531 = vpack.c.b16 %v411, %v401
  %v532 = vpack.c.b16 %v412, %v402
  %v533 = vpack.c.b16 %v413, %v403
  %v534 = vpack.c.b16 %v414, %v404
  %v535 = vpack.c.b16 %v425, %v415
  %v536 = vpack.c.b16 %v426, %v416
  %v537 = vpack.c.b16 %v427, %v417
  %v538 = vpack.c.b16 %v428, %v418
  %v539 = vpack.c.b16 %v429, %v419
  %v540 = vpack.c.b16 %v430, %v420
  %v541 = vpack.c.b16 %v431, %v421
  %v542 = vpack.c.b16 %v432, %v422
  %v543 = vpack.c.b16 %v433, %v423
  %v544 = vpack.c.b16 %v434, %v424
  %v545 = vpack.c.b16 %v445, %v435
  %v546 = vpack.c.b16 %v446, %v436
  %v547 = vpack.c.b16 %v447, %v437
  %v548 = vpack.c.b16 %v448, %v438
  %v549 = vpack.c.b16 %v449, %v439
  %v550 = vpack.c.b16 %v450, %v440
  %v551 = vpack.c.b16 %v451, %v441
  %v552 = vpack.c.b16 %v452, %v442
  %v553 = vpack.c.b16 %v453, %v443
  %v554 = vpack.c.b16 %v454, %v444
  %v555 = vpack.c.b16 %v465, %v455
  %v556 = vpack.c.b16 %v466, %v456
  %v557 = vpack.c.b16 %v467, %v457
  %v558 = vpack.c.b16 %v468, %v458
  %v559 = vpack.c.b16 %v469, %v459
  %v560 = vpack.c.b16 %v470, %v460
  %v561 = vpack.c.b16 %v471, %v461
  %v562 = vpack.c.b16 %v472, %v462
  %v563 = vpack.c.b16 %v473, %v463
  %v564 = vpack.c.b16 %v474, %v464
  %v565 = vpack.c.b16 %v485, %v475
  %v566 = vpack.c.b16 %v486, %v476
  %v567 = vpack.c.b16 %v487, %v477
  %v568 = vpack.c.b16 %v488, %v478
  %v569 = vpack.c.b16 %v489, %v479
  %v570 = vpack.c.b16 %v490, %v480
  %v571 = vpack.c.b16 %v491, %v481
  %v572 = vpack.c.b16 %v492, %v482
  %v573 = vpack.c.b16 %v493, %v483
  %v574 = vpack.c.b16 %v494, %v484
  %v800 = vunpack.c.l.b16 %v95
  %v801 = vunpack.c.l.b16 %v96
  %v802 = vunpack.c.l.b16 %v97
  %v803 = vunpack.c.l.b16 %v98
  %v804 = vunpack.c.l.b16 %v99
  %v805 = vunpack.c.l.b16 %v100
  %v806 = vunpack.c.l.b16 %v101
  %v807 = vunpack.c.l.b16 %v102
  %v808 = vunpack.c.l.b16 %v103
  %v809 = vunpack.c.l.b16 %v104
  %v810 = vunpack.c.l.b16 %v105
  %v811 = vunpack.c.l.b16 %v106
  %v812 = vunpack.c.l.b16 %v107
  %v813 = vunpack.c.l.b16 %v108
  %v814 = vunpack.c.l.b16 %v109
  %v815 = vunpack.c.l.b16 %v110
  %v816 = vunpack.c.l.b16 %v111
  %v817 = vunpack.c.l.b16 %v112
  %v818 = vunpack.c.l.b16 %v113
  %v819 = vunpack.c.l.b16 %v114
  %v820 = vunpack.c.l.b16 %v115
  %v821 = vunpack.c.l.b16 %v116
  %v822 = vunpack.c.l.b16 %v117
  %v823 = vunpack.c.l.b16 %v118
  %v824 = vunpack.c.l.b16 %v119
  %v825 = vunpack.c.l.b16 %v120
  %v826 = vunpack.c.l.b16 %v121
  %v827 = vunpack.c.l.b16 %v122
  %v828 = vunpack.c.l.b16 %v123
  %v829 = vunpack.c.l.b16 %v124
  %v830 = vunpack.c.l.b16 %v125
  %v831 = vunpack.c.l.b16 %v126
  %v832 = vunpack.c.l.b16 %v127
  %v833 = vunpack.c.l.b16 %v128
  %v834 = vunpack.c.l.b16 %v129
  %v835 = vunpack.c.l.b16 %v130
  %v836 = vunpack.c.l.b16 %v131
  %v837 = vunpack.c.l.b16 %v132
  %v838 = vunpack.c.l.b16 %v133
  %v839 = vunpack.c.l.b16 %v134
  %v840 = vunpack.c.l.b16 %v135
  %v841 = vunpack.c.l.b16 %v136
  %v842 = vunpack.c.l.b16 %v137
  %v843 = vunpack.c.l.b16 %v138
  %v844 = vunpack.c.l.b16 %v139
  %v845 = vunpack.c.l.b16 %v140
  %v846 = vunpack.c.l.b16 %v141
  %v847 = vunpack.c.l.b16 %v142
  %v848 = vunpack.c.l.b16 %v143
  %v849 = vunpack.c.l.b16 %v144
  %v850 = vunpack.c.l.b16 %v145
  %v851 = vunpack.c.l.b16 %v146
  %v852 = vunpack.c.l.b16 %v147
  %v853 = vunpack.c.l.b16 %v148
  %v854 = vunpack.c.l.b16 %v149
  %v855 = vunpack.c.l.b16 %v150
  %v856 = vunpack.c.l.b16 %v151
  %v857 = vunpack.c.l.b16 %v152
  %v858 = vunpack.c.l.b16 %v153
  %v859 = vunpack.c.l.b16 %v154
  %v860 = vunpack.c.l.b16 %v155
  %v861 = vunpack.c.l.b16 %v156
  %v862 = vunpack.c.l.b16 %v157
  %v863 = vunpack.c.l.b16 %v158
  %v864 = vunpack.c.l.b16 %v159
  %v865 = vunpack.c.l.b16 %v160
  %v866 = vunpack.c.l.b16 %v161
  %v867 = vunpack.c.l.b16 %v162
  %v868 = vunpack.c.l.b16 %v163
  %v869 = vunpack.c.l.b16 %v164
  %v870 = vunpack.c.l.b16 %v165
  %v871 = vunpack.c.l.b16 %v166
  %v872 = vunpack.c.l.b16 %v167
  %v873 = vunpack.c.l.b16 %v168
  %v874 = vunpack.c.l.b16 %v169
  %v875 = vunpack.c.l.b16 %v170
  %v876 = vunpack.c.l.b16 %v171
  %v877 = vunpack.c.l.b16 %v172
  %v878 = vunpack.c.l.b16 %v173
  %v879 = vunpack.c.l.b16 %v174
  %v880 = vunpack.c.l.b16 %v175
  %v881 = vunpack.c.l.b16 %v176
  %v882 = vunpack.c.l.b16 %v177
  %v883 = vunpack.c.l.b16 %v178
  %v884 = vunpack.c.l.b16 %v179
  %v885 = vunpack.c.l.b16 %v180
  %v886 = vunpack.c.l.b16 %v181
  %v887 = vunpack.c.l.b16 %v182
  %v888 = vunpack.c.l.b16 %v183
  %v889 = vunpack.c.l.b16 %v184
  %v890 = vunpack.c.l.b16 %v185
  %v891 = vunpack.c.l.b16 %v186
  %v892 = vunpack.c.l.b16 %v187
  %v893 = vunpack.c.l.b16 %v188
  %v894 = vunpack.c.l.b16 %v189
  %v895 = vunpack.c.l.b16 %v190
  %v896 = vunpack.c.l.b16 %v191
  %v897 = vunpack.c.l.b16 %v192
  %v898 = vunpack.c.l.b16 %v193
  %v899 = vunpack.c.l.b16 %v194
  %v900 = vunpack.c.l.b16 %v195
  %v901 = vunpack.c.l.b16 %v196
  %v902 = vunpack.c.l.b16 %v197
  %v903 = vunpack.c.l.b16 %v198
  %v904 = vunpack.c.l.b16 %v199
  %v905 = vunpack.c.l.b16 %v200
  %v906 = vunpack.c.l.b16 %v201
  %v907 = vunpack.c.l.b16 %v202
  %v908 = vunpack.c.l.b16 %v203
  %v909 = vunpack.c.l.b16 %v204
  %v910 = vunpack.c.l.b16 %v205
  %v911 = vunpack.c.l.b16 %v206
  %v912 = vunpack.c.l.b16 %v207
  %v913 = vunpack.c.l.b16 %v208
  %v914 = vunpack.c.l.b16 %v209
  %v915 = vunpack.c.l.b16 %v210
  %v916 = vunpack.c.l.b16 %v211
  %v917 = vunpack.c.l.b16 %v212
  %v918 = vunpack.c.l.b16 %v213
  %v919 = vunpack.c.l.b16 %v214
  %v920 = vunpack.c.l.b16 %v215
  %v921 = vunpack.c.l.b16 %v216
  %v922 = vunpack.c.l.b16 %v217
  %v923 = vunpack.c.l.b16 %v218
  %v924 = vunpack.c.l.b16 %v219
  %v925 = vunpack.c.l.b16 %v220
  %v926 = vunpack.c.l.b16 %v221
  %v927 = vunpack.c.l.b16 %v222
  %v928 = vunpack.c.l.b16 %v223
  %v929 = vunpack.c.l.b16 %v224
  %v930 = vunpack.c.l.b16 %v225
  %v931 = vunpack.c.l.b16 %v226
  %v932 = vunpack.c.l.b16 %v227
  %v933 = vunpack.c.l.b16 %v228
  %v934 = vunpack.c.l.b16 %v229
  %v935 = vunpack.c.l.b16 %v230
  %v936 = vunpack.c.l.b16 %v231
  %v937 = vunpack.c.l.b16 %v232
  %v938 = vunpack.c.l.b16 %v233
  %v939 = vunpack.c.l.b16 %v234
  %v940 = vunpack.c.l.b16 %v235
  %v941 = vunpack.c.l.b16 %v236
  %v942 = vunpack.c.l.b16 %v237
  %v943 = vunpack.c.l.b16 %v238
  %v944 = vunpack.c.l.b16 %v239
  %v945 = vunpack.c.l.b16 %v240
  %v946 = vunpack.c.l.b16 %v241
  %v947 = vunpack.c.l.b16 %v242
  %v948 = vunpack.c.l.b16 %v243
  %v949 = vunpack.c.l.b16 %v244
  %v950 = vunpack.c.l.b16 %v245
  %v951 = vunpack.c.l.b16 %v246
  %v952 = vunpack.c.l.b16 %v247
  %v953 = vpack.c.b16 %v801, %v800
  %v954 = vpack.c.b16 %v803, %v802
  %v955 = vpack.c.b16 %v805, %v804
  %v956 = vpack.c.b16 %v807, %v806
  %v957 = vpack.c.b16 %v809, %v808
  %v958 = vpack.c.b16 %v811, %v810
  %v959 = vpack.c.b16 %v813, %v812
  %v960 = vpack.c.b16 %v815, %v814
  %v961 = vpack.c.b16 %v817, %v816
  %v962 = vpack.c.b16 %v819, %v818
  %v963 = vpack.c.b16 %v821, %v820
  %v964 = vpack.c.b16 %v823, %v822
  %v965 = vpack.c.b16 %v825, %v824
  %v966 = vpack.c.b16 %v827, %v826
  %v967 = vpack.c.b16 %v829, %v828
  %v968 = vpack.c.b16 %v831, %v830
  %v969 = vpack.c.b16 %v833, %v832
  %v970 = vpack.c.b16 %v835, %v834
  %v971 = vpack.c.b16 %v837, %v836
  %v972 = vpack.c.b16 %v839, %v838
  %v973 = vpack.c.b16 %v841, %v840
  %v974 = vpack.c.b16 %v843, %v842
  %v975 = vpack.c.b16 %v845, %v844
  %v976 = vpack.c.b16 %v847, %v846
  %v977 = vpack.c.b16 %v849, %v848
  %v978 = vpack.c.b16 %v851, %v850
  %v979 = vpack.c.b16 %v853, %v852
  %v980 = vpack.c.b16 %v855, %v854
  %v981 = vpack.c.b16 %v857, %v856
  %v982 = vpack.c.b16 %v859, %v858
  %v983 = vpack.c.b16 %v861, %v860
  %v984 = vpack.c.b16 %v863, %v862
  %v985 = vpack.c.b16 %v865, %v864
  %v986 = vpack.c.b16 %v867, %v866
  %v987 = vpack.c.b16 %v869, %v868
  %v988 = vpack.c.b16 %v871, %v870
  %v989 = vpack.c.b16 %v873, %v872
  %v990 = vpack.c.b16 %v875, %v874
  %v991 = vpack.c.b16 %v877, %v876
  %v992 = vpack.c.b16 %v879, %v878
  %v993 = vpack.c.b16 %v881, %v880
  %v994 = vpack.c.b16 %v883, %v882
  %v995 = vpack.c.b16 %v885, %v884
  %v996 = vpack.c.b16 %v887, %v886
  %v997 = vpack.c.b16 %v889, %v888
  %v998 = vpack.c.b16 %v891, %v890
  %v999 = vpack.c.b16 %v893, %v892
  %v1000 = vpack.c.b16 %v895, %v894
  %v1001 = vpack.c.b16 %v897, %v896
  %v1002 = vpack.c.b16 %v899, %v898
  %v1003 = vpack.c.b16 %v901, %v900
  %v1004 = vpack.c.b16 %v903, %v902
  %v1005 = vpack.c.b16 %v905, %v904
  %v1006 = vpack.c.b16 %v907, %v906
  %v1007 = vpack.c.b16 %v909, %v908
  %v1008 = vpack.c.b16 %v911, %v910
  %v1009 = vpack.c.b16 %v913, %v912
  %v1010 = vpack.c.b16 %v915, %v914
  %v1011 = vpack.c.b16 %v917, %v916
  %v1012 = vpack.c.b16 %v919, %v918
  %v1013 = vpack.c.b16 %v921, %v920
  %v1014 = vpack.c.b16 %v923, %v922
  %v1015 = vpack.c.b16 %v925, %v924
  %v1016 = vpack.c.b16 %v927, %v926
  %v1017 = vpack.c.b16 %v929, %v928
  %v1018 = vpack.c.b16 %v931, %v930
  %v1019 = vpack.c.b16 %v933, %v932
  %v1020 = vpack.c.b16 %v935, %v934
  %v1021 = vpack.c.b16 %v937, %v936
  %v1022 = vpack.c.b16 %v939, %v938
  %v1023 = vpack.c.b16 %v941, %v940
  %v1024 = vpack.c.b16 %v943, %v942
  %v1025 = vpack.c.b16 %v945, %v944
  %v1026 = vpack.c.b16 %v947, %v946
  %v1027 = vpack.c.b16 %v949, %v948
  %v1028 = vpack.c.b16 %v951, %v950
  %v1029 = vpack.c.b16 %v952, %v952
  %vm1106 = vcmask 588800
  %v1108 = vsel %vm1106, %v504, 0
  %v1111 = vsel %vm1106, %v514, 0
  %v1114 = vsel %vm1106, %v524, 0
  %v1117 = vsel %vm1106, %v534, 0
  %v1120 = vsel %vm1106, %v544, 0
  %v1123 = vsel %vm1106, %v554, 0
  %v1126 = vsel %vm1106, %v564, 0
  %v1129 = vsel %vm1106, %v574, 0
  %vm1131 = vcmask 1043456
  %v1133 = vsel %vm1131, %v1029, 0
  %1135 = vmatprep.subr.bf16.mxu0 0
  %1136 = vmatpush1.bf16.msra.mxu0 %v953
  %1137 = vmatprep.subr.bf16.mxu0 0
  %1138 = vmatpush1.bf16.msra.mxu0 %v954
  %1139 = vmatprep.subr.bf16.mxu0 0
  %1140 = vmatpush1.bf16.msra.mxu0 %v955
  %1141 = vmatprep.subr.bf16.mxu0 0
  %1142 = vmatpush1.bf16.msra.mxu0 %v956
  %1143 = vmatprep.subr.bf16.mxu0 0
  %1144 = vmatpush1.bf16.msra.mxu0 %v957
  %1145 = vmatprep.subr.bf16.mxu0 0
  %1146 = vmatpush1.bf16.msra.mxu0 %v958
  %1147 = vmatprep.subr.bf16.mxu0 0
  %1148 = vmatpush1.bf16.msra.mxu0 %v959
  %1149 = vmatprep.subr.bf16.mxu0 0
  %1150 = vmatpush1.bf16.msra.mxu0 %v960
  %1151 = vmatprep.subr.bf16.mxu0 0
  %1152 = vmatpush1.bf16.msra.mxu0 %v961
  %1153 = vmatprep.subr.bf16.mxu0 0
  %1154 = vmatpush1.bf16.msra.mxu0 %v962
  %1155 = vmatprep.subr.bf16.mxu0 0
  %1156 = vmatpush1.bf16.msra.mxu0 %v963
  %1157 = vmatprep.subr.bf16.mxu0 0
  %1158 = vmatpush1.bf16.msra.mxu0 %v964
  %1159 = vmatprep.subr.bf16.mxu0 0
  %1160 = vmatpush1.bf16.msra.mxu0 %v965
  %1161 = vmatprep.subr.bf16.mxu0 0
  %1162 = vmatpush1.bf16.msra.mxu0 %v966
  %1163 = vmatprep.subr.bf16.mxu0 0
  %1164 = vmatpush1.bf16.msra.mxu0 %v967
  %1165 = vmatprep.subr.bf16.mxu0 0
  %1166 = vmatpush1.bf16.msra.mxu0 %v968
  %1167 = vmatprep.mubr.bf16.mxu0 %v496
  %1168 = vmatmul.mubr.bf16.gmra.mrb[0].mxu0 %v495
  %v1169 = vpop.f32.mrb[0].mxu0
  %v1170 = vadd.f32 %v253, %v1169
  %v1171 = vpop.f32.mrb[0].mxu0
  %v1172 = vpop.f32.mrb[0].mxu0
  %v1173 = vadd.f32 %v253, %v1172
  %v1174 = vpop.f32.mrb[0].mxu0
  %1175 = vmatprep.mubr.bf16.mxu0 %v506
  %1176 = vmatmul.mubr.bf16.gmra.mrb[0].mxu0 %v505
  %v1177 = vpop.f32.mrb[0].mxu0
  %v1178 = vadd.f32 %v253, %v1177
  %v1179 = vpop.f32.mrb[0].mxu0
  %v1180 = vpop.f32.mrb[0].mxu0
  %v1181 = vadd.f32 %v253, %v1180
  %v1182 = vpop.f32.mrb[0].mxu0
  %1183 = vmatprep.mubr.bf16.mxu0 %v516
  %1184 = vmatmul.mubr.bf16.gmra.mrb[0].mxu0 %v515
  %v1185 = vpop.f32.mrb[0].mxu0
  %v1186 = vadd.f32 %v253, %v1185
  %v1187 = vpop.f32.mrb[0].mxu0
  %v1188 = vpop.f32.mrb[0].mxu0
  %v1189 = vadd.f32 %v253, %v1188
  %v1190 = vpop.f32.mrb[0].mxu0
  %1191 = vmatprep.mubr.bf16.mxu0 %v526
  %1192 = vmatmul.mubr.bf16.gmra.mrb[0].mxu0 %v525
  %v1193 = vpop.f32.mrb[0].mxu0
  %v1194 = vadd.f32 %v253, %v1193
  %v1195 = vpop.f32.mrb[0].mxu0
  %v1196 = vpop.f32.mrb[0].mxu0
  %v1197 = vadd.f32 %v253, %v1196
  %v1198 = vpop.f32.mrb[0].mxu0
  %1199 = vmatprep.mubr.bf16.mxu0 %v536
  %1200 = vmatmul.mubr.bf16.gmra.mrb[0].mxu0 %v535
  %v1201 = vpop.f32.mrb[0].mxu0
  %v1202 = vadd.f32 %v253, %v1201
  %v1203 = vpop.f32.mrb[0].mxu0
  %v1204 = vpop.f32.mrb[0].mxu0
  %v1205 = vadd.f32 %v253, %v1204
  %v1206 = vpop.f32.mrb[0].mxu0
  %1207 = vmatprep.mubr.bf16.mxu0 %v546
  %1208 = vmatmul.mubr.bf16.gmra.mrb[0].mxu0 %v545
  %v1209 = vpop.f32.mrb[0].mxu0
  %v1210 = vadd.f32 %v253, %v1209
  %v1211 = vpop.f32.mrb[0].mxu0
  %v1212 = vpop.f32.mrb[0].mxu0
  %v1213 = vadd.f32 %v253, %v1212
  %v1214 = vpop.f32.mrb[0].mxu0
  %1215 = vmatprep.mubr.bf16.mxu0 %v556
  %1216 = vmatmul.mubr.bf16.gmra.mrb[0].mxu0 %v555
  %v1217 = vpop.f32.mrb[0].mxu0
  %v1218 = vadd.f32 %v253, %v1217
  %v1219 = vpop.f32.mrb[0].mxu0
  %v1220 = vpop.f32.mrb[0].mxu0
  %v1221 = vadd.f32 %v253, %v1220
  %v1222 = vpop.f32.mrb[0].mxu0
  %1223 = vmatprep.mubr.bf16.mxu0 %v566
  %1224 = vmatmul.mubr.bf16.gmra.mrb[0].mxu0 %v565
  %v1225 = vpop.f32.mrb[0].mxu0
  %v1226 = vadd.f32 %v253, %v1225
  %v1227 = vpop.f32.mrb[0].mxu0
  %v1228 = vpop.f32.mrb[0].mxu0
  %v1229 = vadd.f32 %v253, %v1228
  %v1230 = vpop.f32.mrb[0].mxu0
  %1231 = vdwg.mxu0
  %1232 = vmatprep.subr.bf16.mxu0 0
  %1233 = vmatpush1.bf16.msra.mxu0 %v969
  %1234 = vmatprep.subr.bf16.mxu0 0
  %1235 = vmatpush1.bf16.msra.mxu0 %v970
  %1236 = vmatprep.subr.bf16.mxu0 0
  %1237 = vmatpush1.bf16.msra.mxu0 %v971
  %1238 = vmatprep.subr.bf16.mxu0 0
  %1239 = vmatpush1.bf16.msra.mxu0 %v972
  %1240 = vmatprep.subr.bf16.mxu0 0
  %1241 = vmatpush1.bf16.msra.mxu0 %v973
  %1242 = vmatprep.subr.bf16.mxu0 0
  %1243 = vmatpush1.bf16.msra.mxu0 %v974
  %1244 = vmatprep.subr.bf16.mxu0 0
  %1245 = vmatpush1.bf16.msra.mxu0 %v975
  %1246 = vmatprep.subr.bf16.mxu0 0
  %1247 = vmatpush1.bf16.msra.mxu0 %v976
  %1248 = vmatprep.subr.bf16.mxu0 0
  %1249 = vmatpush1.bf16.msra.mxu0 %v977
  %1250 = vmatprep.subr.bf16.mxu0 0
  %1251 = vmatpush1.bf16.msra.mxu0 %v978
  %1252 = vmatprep.subr.bf16.mxu0 0
  %1253 = vmatpush1.bf16.msra.mxu0 %v979
  %1254 = vmatprep.subr.bf16.mxu0 0
  %1255 = vmatpush1.bf16.msra.mxu0 %v980
  %1256 = vmatprep.subr.bf16.mxu0 0
  %1257 = vmatpush1.bf16.msra.mxu0 %v981
  %1258 = vmatprep.subr.bf16.mxu0 0
  %1259 = vmatpush1.bf16.msra.mxu0 %v982
  %1260 = vmatprep.subr.bf16.mxu0 0
  %1261 = vmatpush1.bf16.msra.mxu0 %v983
  %1262 = vmatprep.subr.bf16.mxu0 0
  %1263 = vmatpush1.bf16.msra.mxu0 %v984
  %1264 = vmatprep.mubr.bf16.mxu0 %v498
  %1265 = vmatmul.mubr.bf16.gmra.mrb[0].mxu0 %v497
  %v1266 = vpop.f32.mrb[0].mxu0
  %v1267 = vadd.f32 %v1170, %v1266
  %v1268 = vpop.f32.mrb[0].mxu0
  %v1269 = vpop.f32.mrb[0].mxu0
  %v1270 = vadd.f32 %v1173, %v1269
  %v1271 = vpop.f32.mrb[0].mxu0
  %1272 = vmatprep.mubr.bf16.mxu0 %v508
  %1273 = vmatmul.mubr.bf16.gmra.mrb[0].mxu0 %v507
  %v1274 = vpop.f32.mrb[0].mxu0
  %v1275 = vadd.f32 %v1178, %v1274
  %v1276 = vpop.f32.mrb[0].mxu0
  %v1277 = vpop.f32.mrb[0].mxu0
  %v1278 = vadd.f32 %v1181, %v1277
  %v1279 = vpop.f32.mrb[0].mxu0
  %1280 = vmatprep.mubr.bf16.mxu0 %v518
  %1281 = vmatmul.mubr.bf16.gmra.mrb[0].mxu0 %v517
  %v1282 = vpop.f32.mrb[0].mxu0
  %v1283 = vadd.f32 %v1186, %v1282
  %v1284 = vpop.f32.mrb[0].mxu0
  %v1285 = vpop.f32.mrb[0].mxu0
  %v1286 = vadd.f32 %v1189, %v1285
  %v1287 = vpop.f32.mrb[0].mxu0
  %1288 = vmatprep.mubr.bf16.mxu0 %v528
  %1289 = vmatmul.mubr.bf16.gmra.mrb[0].mxu0 %v527
  %v1290 = vpop.f32.mrb[0].mxu0
  %v1291 = vadd.f32 %v1194, %v1290
  %v1292 = vpop.f32.mrb[0].mxu0
  %v1293 = vpop.f32.mrb[0].mxu0
  %v1294 = vadd.f32 %v1197, %v1293
  %v1295 = vpop.f32.mrb[0].mxu0
  %1296 = vmatprep.mubr.bf16.mxu0 %v538
  %1297 = vmatmul.mubr.bf16.gmra.mrb[0].mxu0 %v537
  %v1298 = vpop.f32.mrb[0].mxu0
  %v1299 = vadd.f32 %v1202, %v1298
  %v1300 = vpop.f32.mrb[0].mxu0
  %v1301 = vpop.f32.mrb[0].mxu0
  %v1302 = vadd.f32 %v1205, %v1301
  %v1303 = vpop.f32.mrb[0].mxu0
  %1304 = vmatprep.mubr.bf16.mxu0 %v548
  %1305 = vmatmul.mubr.bf16.gmra.mrb[0].mxu0 %v547
  %v1306 = vpop.f32.mrb[0].mxu0
  %v1307 = vadd.f32 %v1210, %v1306
  %v1308 = vpop.f32.mrb[0].mxu0
  %v1309 = vpop.f32.mrb[0].mxu0
  %v1310 = vadd.f32 %v1213, %v1309
  %v1311 = vpop.f32.mrb[0].mxu0
  %1312 = vmatprep.mubr.bf16.mxu0 %v558
  %1313 = vmatmul.mubr.bf16.gmra.mrb[0].mxu0 %v557
  %v1314 = vpop.f32.mrb[0].mxu0
  %v1315 = vadd.f32 %v1218, %v1314
  %v1316 = vpop.f32.mrb[0].mxu0
  %v1317 = vpop.f32.mrb[0].mxu0
  %v1318 = vadd.f32 %v1221, %v1317
  %v1319 = vpop.f32.mrb[0].mxu0
  %1320 = vmatprep.mubr.bf16.mxu0 %v568
  %1321 = vmatmul.mubr.bf16.gmra.mrb[0].mxu0 %v567
  %v1322 = vpop.f32.mrb[0].mxu0
  %v1323 = vadd.f32 %v1226, %v1322
  %v1324 = vpop.f32.mrb[0].mxu0
  %v1325 = vpop.f32.mrb[0].mxu0
  %v1326 = vadd.f32 %v1229, %v1325
  %v1327 = vpop.f32.mrb[0].mxu0
  %1328 = vdwg.mxu0
  %1329 = vmatprep.subr.bf16.mxu0 0
  %1330 = vmatpush1.bf16.msra.mxu0 %v985
  %1331 = vmatprep.subr.bf16.mxu0 0
  %1332 = vmatpush1.bf16.msra.mxu0 %v986
  %1333 = vmatprep.subr.bf16.mxu0 0
  %1334 = vmatpush1.bf16.msra.mxu0 %v987
  %1335 = vmatprep.subr.bf16.mxu0 0
  %1336 = vmatpush1.bf16.msra.mxu0 %v988
  %1337 = vmatprep.subr.bf16.mxu0 0
  %1338 = vmatpush1.bf16.msra.mxu0 %v989
  %1339 = vmatprep.subr.bf16.mxu0 0
  %1340 = vmatpush1.bf16.msra.mxu0 %v990
  %1341 = vmatprep.subr.bf16.mxu0 0
  %1342 = vmatpush1.bf16.msra.mxu0 %v991
  %1343 = vmatprep.subr.bf16.mxu0 0
  %1344 = vmatpush1.bf16.msra.mxu0 %v992
  %1345 = vmatprep.subr.bf16.mxu0 0
  %1346 = vmatpush1.bf16.msra.mxu0 %v993
  %1347 = vmatprep.subr.bf16.mxu0 0
  %1348 = vmatpush1.bf16.msra.mxu0 %v994
  %1349 = vmatprep.subr.bf16.mxu0 0
  %1350 = vmatpush1.bf16.msra.mxu0 %v995
  %1351 = vmatprep.subr.bf16.mxu0 0
  %1352 = vmatpush1.bf16.msra.mxu0 %v996
  %1353 = vmatprep.subr.bf16.mxu0 0
  %1354 = vmatpush1.bf16.msra.mxu0 %v997
  %1355 = vmatprep.subr.bf16.mxu0 0
  %1356 = vmatpush1.bf16.msra.mxu0 %v998
  %1357 = vmatprep.subr.bf16.mxu0 0
  %1358 = vmatpush1.bf16.msra.mxu0 %v999
  %1359 = vmatprep.subr.bf16.mxu0 0
  %1360 = vmatpush1.bf16.msra.mxu0 %v1000
  %1361 = vmatprep.mubr.bf16.mxu0 %v500
  %1362 = vmatmul.mubr.bf16.gmra.mrb[0].mxu0 %v499
  %v1363 = vpop.f32.mrb[0].mxu0
  %v1364 = vadd.f32 %v1267, %v1363
  %v1365 = vpop.f32.mrb[0].mxu0
  %v1366 = vpop.f32.mrb[0].mxu0
  %v1367 = vadd.f32 %v1270, %v1366
  %v1368 = vpop.f32.mrb[0].mxu0
  %1369 = vmatprep.mubr.bf16.mxu0 %v510
  %1370 = vmatmul.mubr.bf16.gmra.mrb[0].mxu0 %v509
  %v1371 = vpop.f32.mrb[0].mxu0
  %v1372 = vadd.f32 %v1275, %v1371
  %v1373 = vpop.f32.mrb[0].mxu0
  %v1374 = vpop.f32.mrb[0].mxu0
  %v1375 = vadd.f32 %v1278, %v1374
  %v1376 = vpop.f32.mrb[0].mxu0
  %1377 = vmatprep.mubr.bf16.mxu0 %v520
  %1378 = vmatmul.mubr.bf16.gmra.mrb[0].mxu0 %v519
  %v1379 = vpop.f32.mrb[0].mxu0
  %v1380 = vadd.f32 %v1283, %v1379
  %v1381 = vpop.f32.mrb[0].mxu0
  %v1382 = vpop.f32.mrb[0].mxu0
  %v1383 = vadd.f32 %v1286, %v1382
  %v1384 = vpop.f32.mrb[0].mxu0
  %1385 = vmatprep.mubr.bf16.mxu0 %v530
  %1386 = vmatmul.mubr.bf16.gmra.mrb[0].mxu0 %v529
  %v1387 = vpop.f32.mrb[0].mxu0
  %v1388 = vadd.f32 %v1291, %v1387
  %v1389 = vpop.f32.mrb[0].mxu0
  %v1390 = vpop.f32.mrb[0].mxu0
  %v1391 = vadd.f32 %v1294, %v1390
  %v1392 = vpop.f32.mrb[0].mxu0
  %1393 = vmatprep.mubr.bf16.mxu0 %v540
  %1394 = vmatmul.mubr.bf16.gmra.mrb[0].mxu0 %v539
  %v1395 = vpop.f32.mrb[0].mxu0
  %v1396 = vadd.f32 %v1299, %v1395
  %v1397 = vpop.f32.mrb[0].mxu0
  %v1398 = vpop.f32.mrb[0].mxu0
  %v1399 = vadd.f32 %v1302, %v1398
  %v1400 = vpop.f32.mrb[0].mxu0
  %1401 = vmatprep.mubr.bf16.mxu0 %v550
  %1402 = vmatmul.mubr.bf16.gmra.mrb[0].mxu0 %v549
  %v1403 = vpop.f32.mrb[0].mxu0
  %v1404 = vadd.f32 %v1307, %v1403
  %v1405 = vpop.f32.mrb[0].mxu0
  %v1406 = vpop.f32.mrb[0].mxu0
  %v1407 = vadd.f32 %v1310, %v1406
  %v1408 = vpop.f32.mrb[0].mxu0
  %1409 = vmatprep.mubr.bf16.mxu0 %v560
  %1410 = vmatmul.mubr.bf16.gmra.mrb[0].mxu0 %v559
  %v1411 = vpop.f32.mrb[0].mxu0
  %v1412 = vadd.f32 %v1315, %v1411
  %v1413 = vpop.f32.mrb[0].mxu0
  %v1414 = vpop.f32.mrb[0].mxu0
  %v1415 = vadd.f32 %v1318, %v1414
  %v1416 = vpop.f32.mrb[0].mxu0
  %1417 = vmatprep.mubr.bf16.mxu0 %v570
  %1418 = vmatmul.mubr.bf16.gmra.mrb[0].mxu0 %v569
  %v1419 = vpop.f32.mrb[0].mxu0
  %v1420 = vadd.f32 %v1323, %v1419
  %v1421 = vpop.f32.mrb[0].mxu0
  %v1422 = vpop.f32.mrb[0].mxu0
  %v1423 = vadd.f32 %v1326, %v1422
  %v1424 = vpop.f32.mrb[0].mxu0
  %1425 = vdwg.mxu0
  %1426 = vmatprep.subr.bf16.mxu0 0
  %1427 = vmatpush1.bf16.msra.mxu0 %v1001
  %1428 = vmatprep.subr.bf16.mxu0 0
  %1429 = vmatpush1.bf16.msra.mxu0 %v1002
  %1430 = vmatprep.subr.bf16.mxu0 0
  %1431 = vmatpush1.bf16.msra.mxu0 %v1003
  %1432 = vmatprep.subr.bf16.mxu0 0
  %1433 = vmatpush1.bf16.msra.mxu0 %v1004
  %1434 = vmatprep.subr.bf16.mxu0 0
  %1435 = vmatpush1.bf16.msra.mxu0 %v1005
  %1436 = vmatprep.subr.bf16.mxu0 0
  %1437 = vmatpush1.bf16.msra.mxu0 %v1006
  %1438 = vmatprep.subr.bf16.mxu0 0
  %1439 = vmatpush1.bf16.msra.mxu0 %v1007
  %1440 = vmatprep.subr.bf16.mxu0 0
  %1441 = vmatpush1.bf16.msra.mxu0 %v1008
  %1442 = vmatprep.subr.bf16.mxu0 0
  %1443 = vmatpush1.bf16.msra.mxu0 %v1009
  %1444 = vmatprep.subr.bf16.mxu0 0
  %1445 = vmatpush1.bf16.msra.mxu0 %v1010
  %1446 = vmatprep.subr.bf16.mxu0 0
  %1447 = vmatpush1.bf16.msra.mxu0 %v1011
  %1448 = vmatprep.subr.bf16.mxu0 0
  %1449 = vmatpush1.bf16.msra.mxu0 %v1012
  %1450 = vmatprep.subr.bf16.mxu0 0
  %1451 = vmatpush1.bf16.msra.mxu0 %v1013
  %1452 = vmatprep.subr.bf16.mxu0 0
  %1453 = vmatpush1.bf16.msra.mxu0 %v1014
  %1454 = vmatprep.subr.bf16.mxu0 0
  %1455 = vmatpush1.bf16.msra.mxu0 %v1015
  %1456 = vmatprep.subr.bf16.mxu0 0
  %1457 = vmatpush1.bf16.msra.mxu0 %v1016
  %1458 = vmatprep.mubr.bf16.mxu0 %v502
  %1459 = vmatmul.mubr.bf16.gmra.mrb[0].mxu0 %v501
  %v1460 = vpop.f32.mrb[0].mxu0
  %v1461 = vadd.f32 %v1364, %v1460
  %v1462 = vpop.f32.mrb[0].mxu0
  %v1463 = vpop.f32.mrb[0].mxu0
  %v1464 = vadd.f32 %v1367, %v1463
  %v1465 = vpop.f32.mrb[0].mxu0
  %1466 = vmatprep.mubr.bf16.mxu0 %v512
  %1467 = vmatmul.mubr.bf16.gmra.mrb[0].mxu0 %v511
  %v1468 = vpop.f32.mrb[0].mxu0
  %v1469 = vadd.f32 %v1372, %v1468
  %v1470 = vpop.f32.mrb[0].mxu0
  %v1471 = vpop.f32.mrb[0].mxu0
  %v1472 = vadd.f32 %v1375, %v1471
  %v1473 = vpop.f32.mrb[0].mxu0
  %1474 = vmatprep.mubr.bf16.mxu0 %v522
  %1475 = vmatmul.mubr.bf16.gmra.mrb[0].mxu0 %v521
  %v1476 = vpop.f32.mrb[0].mxu0
  %v1477 = vadd.f32 %v1380, %v1476
  %v1478 = vpop.f32.mrb[0].mxu0
  %v1479 = vpop.f32.mrb[0].mxu0
  %v1480 = vadd.f32 %v1383, %v1479
  %v1481 = vpop.f32.mrb[0].mxu0
  %1482 = vmatprep.mubr.bf16.mxu0 %v532
  %1483 = vmatmul.mubr.bf16.gmra.mrb[0].mxu0 %v531
  %v1484 = vpop.f32.mrb[0].mxu0
  %v1485 = vadd.f32 %v1388, %v1484
  %v1486 = vpop.f32.mrb[0].mxu0
  %v1487 = vpop.f32.mrb[0].mxu0
  %v1488 = vadd.f32 %v1391, %v1487
  %v1489 = vpop.f32.mrb[0].mxu0
  %1490 = vmatprep.mubr.bf16.mxu0 %v542
  %1491 = vmatmul.mubr.bf16.gmra.mrb[0].mxu0 %v541
  %v1492 = vpop.f32.mrb[0].mxu0
  %v1493 = vadd.f32 %v1396, %v1492
  %v1494 = vpop.f32.mrb[0].mxu0
  %v1495 = vpop.f32.mrb[0].mxu0
  %v1496 = vadd.f32 %v1399, %v1495
  %v1497 = vpop.f32.mrb[0].mxu0
  %1498 = vmatprep.mubr.bf16.mxu0 %v552
  %1499 = vmatmul.mubr.bf16.gmra.mrb[0].mxu0 %v551
  %v1500 = vpop.f32.mrb[0].mxu0
  %v1501 = vadd.f32 %v1404, %v1500
  %v1502 = vpop.f32.mrb[0].mxu0
  %v1503 = vpop.f32.mrb[0].mxu0
  %v1504 = vadd.f32 %v1407, %v1503
  %v1505 = vpop.f32.mrb[0].mxu0
  %1506 = vmatprep.mubr.bf16.mxu0 %v562
  %1507 = vmatmul.mubr.bf16.gmra.mrb[0].mxu0 %v561
  %v1508 = vpop.f32.mrb[0].mxu0
  %v1509 = vadd.f32 %v1412, %v1508
  %v1510 = vpop.f32.mrb[0].mxu0
  %v1511 = vpop.f32.mrb[0].mxu0
  %v1512 = vadd.f32 %v1415, %v1511
  %v1513 = vpop.f32.mrb[0].mxu0
  %1514 = vmatprep.mubr.bf16.mxu0 %v572
  %1515 = vmatmul.mubr.bf16.gmra.mrb[0].mxu0 %v571
  %v1516 = vpop.f32.mrb[0].mxu0
  %v1517 = vadd.f32 %v1420, %v1516
  %v1518 = vpop.f32.mrb[0].mxu0
  %v1519 = vpop.f32.mrb[0].mxu0
  %v1520 = vadd.f32 %v1423, %v1519
  %v1521 = vpop.f32.mrb[0].mxu0
  %1522 = vdwg.mxu0
  %1523 = vmatprep.subr.bf16.mxu0 0
  %1524 = vmatpush1.bf16.msra.mxu0 %v1017
  %1525 = vmatprep.subr.bf16.mxu0 0
  %1526 = vmatpush1.bf16.msra.mxu0 %v1018
  %1527 = vmatprep.subr.bf16.mxu0 0
  %1528 = vmatpush1.bf16.msra.mxu0 %v1019
  %1529 = vmatprep.subr.bf16.mxu0 0
  %1530 = vmatpush1.bf16.msra.mxu0 %v1020
  %1531 = vmatprep.subr.bf16.mxu0 0
  %1532 = vmatpush1.bf16.msra.mxu0 %v1021
  %1533 = vmatprep.subr.bf16.mxu0 0
  %1534 = vmatpush1.bf16.msra.mxu0 %v1022
  %1535 = vmatprep.subr.bf16.mxu0 0
  %1536 = vmatpush1.bf16.msra.mxu0 %v1023
  %1537 = vmatprep.subr.bf16.mxu0 0
  %1538 = vmatpush1.bf16.msra.mxu0 %v1024
  %1539 = vmatprep.subr.bf16.mxu0 0
  %1540 = vmatpush1.bf16.msra.mxu0 %v1025
  %1541 = vmatprep.subr.bf16.mxu0 0
  %1542 = vmatpush1.bf16.msra.mxu0 %v1026
  %1543 = vmatprep.subr.bf16.mxu0 0
  %1544 = vmatpush1.bf16.msra.mxu0 %v1027
  %1545 = vmatprep.subr.bf16.mxu0 0
  %1546 = vmatpush1.bf16.msra.mxu0 %v1028
  %1547 = vmatprep.subr.bf16.mxu0 0
  %1548 = vmatpush1.bf16.msra.mxu0 %v1133
  %1549 = vmatprep.subr.bf16.mxu0 0
  %1550 = vmatpush1.bf16.msra.mxu0 0
  %1551 = vmatprep.subr.bf16.mxu0 0
  %1552 = vmatpush1.bf16.msra.mxu0 0
  %1553 = vmatprep.subr.bf16.mxu0 0
  %1554 = vmatpush1.bf16.msra.mxu0 0
  %1555 = vmatprep.mubr.bf16.mxu0 %v1108
  %1556 = vmatmul.mubr.bf16.gmra.mrb[0].mxu0 %v503
  %v1557 = vpop.f32.mrb[0].mxu0
  %v1558 = vadd.f32 %v1461, %v1557
  %v1559 = vpop.f32.mrb[0].mxu0
  %v1560 = vpop.f32.mrb[0].mxu0
  %v1561 = vadd.f32 %v1464, %v1560
  %v1562 = vpop.f32.mrb[0].mxu0
  %1563 = vmatprep.mubr.bf16.mxu0 %v1111
  %1564 = vmatmul.mubr.bf16.gmra.mrb[0].mxu0 %v513
  %v1565 = vpop.f32.mrb[0].mxu0
  %v1566 = vadd.f32 %v1469, %v1565
  %v1567 = vpop.f32.mrb[0].mxu0
  %v1568 = vpop.f32.mrb[0].mxu0
  %v1569 = vadd.f32 %v1472, %v1568
  %v1570 = vpop.f32.mrb[0].mxu0
  %1571 = vmatprep.mubr.bf16.mxu0 %v1114
  %1572 = vmatmul.mubr.bf16.gmra.mrb[0].mxu0 %v523
  %v1573 = vpop.f32.mrb[0].mxu0
  %v1574 = vadd.f32 %v1477, %v1573
  %v1575 = vpop.f32.mrb[0].mxu0
  %v1576 = vpop.f32.mrb[0].mxu0
  %v1577 = vadd.f32 %v1480, %v1576
  %v1578 = vpop.f32.mrb[0].mxu0
  %1579 = vmatprep.mubr.bf16.mxu0 %v1117
  %1580 = vmatmul.mubr.bf16.gmra.mrb[0].mxu0 %v533
  %v1581 = vpop.f32.mrb[0].mxu0
  %v1582 = vadd.f32 %v1485, %v1581
  %v1583 = vpop.f32.mrb[0].mxu0
  %v1584 = vpop.f32.mrb[0].mxu0
  %v1585 = vadd.f32 %v1488, %v1584
  %v1586 = vpop.f32.mrb[0].mxu0
  %1587 = vmatprep.mubr.bf16.mxu0 %v1120
  %1588 = vmatmul.mubr.bf16.gmra.mrb[0].mxu0 %v543
  %v1589 = vpop.f32.mrb[0].mxu0
  %v1590 = vadd.f32 %v1493, %v1589
  %v1591 = vpop.f32.mrb[0].mxu0
  %v1592 = vpop.f32.mrb[0].mxu0
  %v1593 = vadd.f32 %v1496, %v1592
  %v1594 = vpop.f32.mrb[0].mxu0
  %1595 = vmatprep.mubr.bf16.mxu0 %v1123
  %1596 = vmatmul.mubr.bf16.gmra.mrb[0].mxu0 %v553
  %v1597 = vpop.f32.mrb[0].mxu0
  %v1598 = vadd.f32 %v1501, %v1597
  %v1599 = vpop.f32.mrb[0].mxu0
  %v1600 = vpop.f32.mrb[0].mxu0
  %v1601 = vadd.f32 %v1504, %v1600
  %v1602 = vpop.f32.mrb[0].mxu0
  %1603 = vmatprep.mubr.bf16.mxu0 %v1126
  %1604 = vmatmul.mubr.bf16.gmra.mrb[0].mxu0 %v563
  %v1605 = vpop.f32.mrb[0].mxu0
  %v1606 = vadd.f32 %v1509, %v1605
  %v1607 = vpop.f32.mrb[0].mxu0
  %v1608 = vpop.f32.mrb[0].mxu0
  %v1609 = vadd.f32 %v1512, %v1608
  %v1610 = vpop.f32.mrb[0].mxu0
  %1611 = vmatprep.mubr.bf16.mxu0 %v1129
  %1612 = vmatmul.mubr.bf16.gmra.mrb[0].mxu0 %v573
  %v1613 = vpop.f32.mrb[0].mxu0
  %v1614 = vadd.f32 %v1517, %v1613
  %v1615 = vpop.f32.mrb[0].mxu0
  %v1616 = vpop.f32.mrb[0].mxu0
  %v1617 = vadd.f32 %v1520, %v1616
  %v1618 = vpop.f32.mrb[0].mxu0
  %1619 = vdwg.mxu0
  %1620 = vst [vmem:[%s3] sm:$0xff] %v1558
  %1621 = vst [vmem:[%s3 + $0x8] sm:$0xff] %v1561
  %1622 = vst [vmem:[%s3 + $0x10] sm:$0xff] %v1566
  %1623 = vst [vmem:[%s3 + $0x18] sm:$0xff] %v1569
  %1624 = vst [vmem:[%s3 + $0x20] sm:$0xff] %v1574
  %1625 = vst [vmem:[%s3 + $0x28] sm:$0xff] %v1577
  %1626 = vst [vmem:[%s3 + $0x30] sm:$0xff] %v1582
  %1627 = vst [vmem:[%s3 + $0x38] sm:$0xff] %v1585
  %1628 = vst [vmem:[%s3 + $0x40] sm:$0xff] %v1590
  %1629 = vst [vmem:[%s3 + $0x48] sm:$0xff] %v1593
  %1630 = vst [vmem:[%s3 + $0x50] sm:$0xff] %v1598
  %1631 = vst [vmem:[%s3 + $0x58] sm:$0xff] %v1601
  %1632 = vst [vmem:[%s3 + $0x60] sm:$0xff] %v1606
  %1633 = vst [vmem:[%s3 + $0x68] sm:$0xff] %v1609
  %1634 = vst [vmem:[%s3 + $0x70] sm:$0xff] %v1614
  %1635 = vst [vmem:[%s3 + $0x78] sm:$0xff] %v1617
  // Predicated region
  $region14: #{upsample_conv_forward.1} parent=0 // pred_check
    _
  $region15: #{upsample_conv_forward.1} parent=0 // pred_check_branch
    %1637 = sbr.rel (0) target = $region17
  $region16: #{upsample_conv_forward.1} parent=0 // pred_region
    _
  $region17: #{upsample_conv_forward.1} parent=0 // pred_fallthru
    _
  // Predicated region
  $region18: #{upsample_conv_forward.1} parent=0 // pred_check
    _
  $region19: #{upsample_conv_forward.1} parent=0 // pred_check_branch
    %1639 = sbr.rel (0) target = $region21
  $region20: #{upsample_conv_forward.1} parent=0 // pred_region
    _
  $region21: #{upsample_conv_forward.1} parent=0 // pred_fallthru
    _

</llo_original>
